<compile_context>
chip_gen: v5e
topology: v5e:2x2
jax: 0.10.0
libtpu: 0.0.40
codegen_flags: <defaults>
</compile_context>

<pallas_src>
import functools

import jax
import jax.numpy as jnp
from jax.experimental import pallas as pl
from jax.experimental.pallas import tpu as pltpu


# ----------------------------------------------------------------------------
# Pallas kernel 1: fused  pre(1x1) -> WN(dilated conv + tanh*sigmoid gate +
#                  res/skip 1x1) -> post(1x1) [+ fused coupling add]
# One grid program per batch element; per-program slab is (C, L) channel-first.
# ----------------------------------------------------------------------------
def _wn_stack_kernel(*refs, n_layers, kernel_size, dilation_rate, hidden,
                     length, has_add):
    H, L, K = hidden, length, kernel_size
    half_k = (K - 1) // 2

    i = 0
    x_ref = refs[i]; i += 1
    add_ref = None
    if has_add:
        add_ref = refs[i]; i += 1
    (pre_w, pre_b, in_wt, in_bt, in_ws, in_bs,
     res_w, res_b, skip_w, skip_b, post_w, post_b) = refs[i:i + 12]
    out_ref = refs[i + 12]

    lane = jax.lax.broadcasted_iota(jnp.int32, (1, L), 1)      # position in sequence

    # pre 1x1 conv: (H, Cin) @ (Cin, L)
    h = jnp.dot(pre_w[...], x_ref[...].astype(jnp.bfloat16),
                preferred_element_type=jnp.float32) + pre_b[...]
    out = jnp.zeros((H, L), jnp.float32)

    # TODO(synk): for large n_layers convert this static unroll to lax.fori_loop
    # with dynamic ref indexing (in_wt[i], ...) to bound vreg live ranges.
    for layer in range(n_layers):
        d = dilation_rate ** layer
        taps = []
        for j in range(K):
            off = (j - half_k) * d
            if off == 0:
                taps.append(h)
            else:
                # "same"-padded dilated shift: lane rotate (XLU) + zero the lanes
                # that wrapped around the sequence boundary.
                rolled = pltpu.roll(h, shift=(-off) % L, axis=1)
                valid = (lane < (L - off)) if off > 0 else (lane >= (-off))
                taps.append(jnp.where(valid, rolled, 0.0))
        # merge all taps into ONE matmul per gate branch: K = kernel_size * H
        hs_cat = jnp.concatenate(taps, axis=0).astype(jnp.bfloat16)   # (K*H, L)
        # TODO(synk): when hidden % 128 == 0 fuse the tanh/sigmoid halves into a
        # single N=2H matmul and split at the 128-lane boundary.
        xt = jnp.dot(in_wt[layer], hs_cat,
                     preferred_element_type=jnp.float32) + in_bt[layer]
        xs = jnp.dot(in_ws[layer], hs_cat,
                     preferred_element_type=jnp.float32) + in_bs[layer]
        # fused_add_tanh_sigmoid_multiply (g = 0) — elementwise kept in f32
        acts = (jnp.tanh(xt) * jax.nn.sigmoid(xs)).astype(jnp.bfloat16)
        if layer < n_layers - 1:                                # residual path
            h = h + jnp.dot(res_w[layer], acts,
                            preferred_element_type=jnp.float32) + res_b[layer]
        out = out + jnp.dot(skip_w[layer], acts,                # skip/output path
                            preferred_element_type=jnp.float32) + skip_b[layer]

    stats = jnp.dot(post_w[...], out.astype(jnp.bfloat16),
                    preferred_element_type=jnp.float32) + post_b[...]
    if has_add:
        stats = stats + add_ref[...]          # fused coupling update: x1 = m + x1
    out_ref[...] = stats.astype(out_ref.dtype)


def _const_spec(w):
    nd = w.ndim
    return pl.BlockSpec(w.shape, lambda b, _n=nd: (0,) * _n)   # weight stays resident


_WN_WEIGHT_NAMES = ('pre_w', 'pre_b', 'in_wt', 'in_bt', 'in_ws', 'in_bs',
                    'res_w', 'res_b', 'skip_w', 'skip_b', 'post_w', 'post_b')


def wn_stack(x_ncl, p, *, kernel_size, dilation_rate, n_layers, add=None):
    """pre(1x1) -> WN -> post(1x1) [+ add].  x_ncl: (B, Cin, L) -> (B, Cout, L)."""
    B, Cin, L = x_ncl.shape
    H = p['pre_w'].shape[0]
    Cout = p['post_w'].shape[0]

    inputs = [x_ncl]
    in_specs = [pl.BlockSpec((None, Cin, L), lambda b: (b, 0, 0))]
    if add is not None:
        inputs.append(add)
        in_specs.append(pl.BlockSpec((None, Cout, L), lambda b: (b, 0, 0)))
    for name in _WN_WEIGHT_NAMES:
        inputs.append(p[name])
        in_specs.append(_const_spec(p[name]))

    kern = functools.partial(_wn_stack_kernel, n_layers=n_layers,
                             kernel_size=kernel_size, dilation_rate=dilation_rate,
                             hidden=H, length=L, has_add=add is not None)
    # TODO(synk): for very long sequences add an L-tile grid axis with a
    # (kernel_size-1)*dilation_rate**(n_layers-1) halo so slabs fit v7x's 64 MiB VMEM.
    # TODO(synk): input_output_aliases for `add` -> output would save one HBM buffer.
    return pl.pallas_call(
        kern,
        grid=(B,),
        in_specs=in_specs,
        out_specs=pl.BlockSpec((None, Cout, L), lambda b: (b, 0, 0)),
        out_shape=jax.ShapeDtypeStruct((B, Cout, L), jnp.float32),
        compiler_params=pltpu.CompilerParams(
            dimension_semantics=("parallel",),
            vmem_limit_bytes=32 * 1024 * 1024),
    )(*inputs)


# ----------------------------------------------------------------------------
# Pallas kernel 2: fused fc_mu + fc_var (nn.Linear over the length axis) +
#                  std = exp(0.5*log_var) + reparameterization  z = mu + eps*std.
# Batch*channels folded into M; fc weights column-tiled over a parallel grid.
# ----------------------------------------------------------------------------
def _fc_reparam_kernel(z_ref, eps_ref, wmu_ref, bmu_ref, wvar_ref, bvar_ref,
                       mu_ref, lv_ref, zo_ref):
    z = z_ref[...].astype(jnp.bfloat16)
    mu = jnp.dot(z, wmu_ref[...], preferred_element_type=jnp.float32) + bmu_ref[...]
    lv = jnp.dot(z, wvar_ref[...], preferred_element_type=jnp.float32) + bvar_ref[...]
    mu_ref[...] = mu
    lv_ref[...] = lv
    zo_ref[...] = mu + eps_ref[...] * jnp.exp(0.5 * lv)        # exp on the EUP


def fc_reparam(z_ncl, eps_ncl, w_mu_t, b_mu, w_var_t, b_var):
    B, C, L = z_ncl.shape
    M = B * C
    z2 = z_ncl.reshape(M, L)
    eps2 = eps_ncl.reshape(M, L)

    if L % 128 == 0:
        tl = 128
        while tl < min(L, 512) and L % (tl * 2) == 0:
            tl *= 2
    else:
        tl = L
    # TODO(synk): for very large L also tile the K (input-length) axis of the
    # (L, L) weights so they never need to be fully VMEM-resident (v7x 64 MiB).
    grid = (L // tl,)

    shp = jax.ShapeDtypeStruct((M, L), jnp.float32)
    col = lambda j: (0, j)
    mu2, lv2, zo2 = pl.pallas_call(
        _fc_reparam_kernel,
        grid=grid,
        in_specs=[pl.BlockSpec((M, L), lambda j: (0, 0)),      # z: full K, resident
                  pl.BlockSpec((M, tl), col),                   # eps column tile
                  pl.BlockSpec((L, tl), col),                   # W_mu^T columns
                  pl.BlockSpec((1, tl), col),
                  pl.BlockSpec((L, tl), col),                   # W_var^T columns
                  pl.BlockSpec((1, tl), col)],
        out_specs=(pl.BlockSpec((M, tl), col),
                   pl.BlockSpec((M, tl), col),
                   pl.BlockSpec((M, tl), col)),
        out_shape=(shp, shp, shp),
        compiler_params=pltpu.CompilerParams(dimension_semantics=("parallel",)),
    )(z2, eps2, w_mu_t, b_mu, w_var_t, b_var)
    rs = lambda t: t.reshape(B, C, L)
    return rs(mu2), rs(lv2), rs(zo2)


# ----------------------------------------------------------------------------
# Pure-JAX references (same bf16-matmul / f32-accumulate contract) for self-check.
# ----------------------------------------------------------------------------
def wn_stack_ref(x_ncl, p, *, kernel_size, dilation_rate, n_layers, add=None):
    B, Cin, L = x_ncl.shape
    H = p['pre_w'].shape[0]
    half_k = (kernel_size - 1) // 2
    f32 = jnp.float32
    dot = functools.partial(jnp.einsum, preferred_element_type=f32)

    h = dot('hc,bcl->bhl', p['pre_w'], x_ncl.astype(jnp.bfloat16)) + p['pre_b'][None]
    out = jnp.zeros((B, H, L), f32)
    for i in range(n_layers):
        d = dilation_rate ** i
        h_b = h.astype(jnp.bfloat16)
        xt = jnp.zeros((B, H, L), f32) + p['in_bt'][i][None]
        xs = jnp.zeros((B, H, L), f32) + p['in_bs'][i][None]
        for j in range(kernel_size):
            off = (j - half_k) * d
            if off > 0:
                hs = jnp.pad(h_b[:, :, off:], ((0, 0), (0, 0), (0, off)))
            elif off < 0:
                hs = jnp.pad(h_b[:, :, :L + off], ((0, 0), (0, 0), (-off, 0)))
            else:
                hs = h_b
            xt = xt + dot('hk,bkl->bhl', p['in_wt'][i][:, j * H:(j + 1) * H], hs)
            xs = xs + dot('hk,bkl->bhl', p['in_ws'][i][:, j * H:(j + 1) * H], hs)
        acts = (jnp.tanh(xt) * jax.nn.sigmoid(xs)).astype(jnp.bfloat16)
        if i < n_layers - 1:
            h = h + dot('hk,bkl->bhl', p['res_w'][i], acts) + p['res_b'][i][None]
        out = out + dot('hk,bkl->bhl', p['skip_w'][i], acts) + p['skip_b'][i][None]
    stats = dot('ch,bhl->bcl', p['post_w'], out.astype(jnp.bfloat16)) + p['post_b'][None]
    if add is not None:
        stats = stats + add
    return stats


def fc_reparam_ref(z_ncl, eps_ncl, w_mu_t, b_mu, w_var_t, b_var):
    B, C, L = z_ncl.shape
    z2 = z_ncl.reshape(B * C, L).astype(jnp.bfloat16)
    dot = functools.partial(jnp.dot, preferred_element_type=jnp.float32)
    mu = dot(z2, w_mu_t) + b_mu
    lv = dot(z2, w_var_t) + b_var
    zo = mu + eps_ncl.reshape(B * C, L) * jnp.exp(0.5 * lv)
    rs = lambda t: t.reshape(B, C, L)
    return rs(mu), rs(lv), rs(zo)


# ----------------------------------------------------------------------------
# Parameter construction (mirrors module __init__ shapes; weights bf16, biases f32).
# ----------------------------------------------------------------------------
def make_wn_params(key, c_in, c_out, hidden, kernel_size, n_layers, zero_post):
    ks = jax.random.split(key, 12)
    sc = 0.1
    nrm = lambda k, s: jax.random.normal(k, s, jnp.float32) * sc
    bf = jnp.bfloat16
    n_res = max(n_layers - 1, 1)
    kh = kernel_size * hidden
    p = dict(
        pre_w=nrm(ks[0], (hidden, c_in)).astype(bf),
        pre_b=nrm(ks[1], (hidden, 1)),
        # dilated conv weights: tanh / sigmoid halves, taps flattened into the K axis
        in_wt=nrm(ks[2], (n_layers, hidden, kh)).astype(bf),
        in_bt=nrm(ks[3], (n_layers, hidden, 1)),
        in_ws=nrm(ks[4], (n_layers, hidden, kh)).astype(bf),
        in_bs=nrm(ks[5], (n_layers, hidden, 1)),
        # res / skip 1x1 convs (res exists only for layers i < n_layers-1)
        res_w=nrm(ks[6], (n_res, hidden, hidden)).astype(bf),
        res_b=nrm(ks[7], (n_res, hidden, 1)),
        skip_w=nrm(ks[8], (n_layers, hidden, hidden)).astype(bf),
        skip_b=nrm(ks[9], (n_layers, hidden, 1)),
    )
    if zero_post:   # post / proj convs are zero-initialized in the PyTorch module
        p['post_w'] = jnp.zeros((c_out, hidden), bf)
        p['post_b'] = jnp.zeros((c_out, 1), jnp.float32)
    else:
        p['post_w'] = nrm(ks[10], (c_out, hidden)).astype(bf)
        p['post_b'] = nrm(ks[11], (c_out, 1))
    return p


def init_flow_generator(key, inter_channels, hidden_channels, kernel_size,
                        scale_factor, dilation_rate, n_layers, n_uplayers,
                        input_length):
    half = inter_channels // 2
    keys = iter(jax.random.split(key, 128))

    def wn():
        return make_wn_params(next(keys), half, half, hidden_channels,
                              kernel_size, n_layers, zero_post=True)

    params = {'flow1': [wn() for _ in range(4)],     # n_flows = 4 coupling layers
              'flow2': [wn() for _ in range(4)]}

    upflow = []
    for _ in range(n_uplayers):
        hier1, hier2 = wn(), wn()
        # Reverse_Hierarchy_flow shares one `pre` conv between both WN branches
        hier2['pre_w'] = hier1['pre_w']
        hier2['pre_b'] = hier1['pre_b']
        upflow.append({'up': {'wn0': wn(), 'wn1': wn()},
                       'hier': {'wn1': hier1, 'wn2': hier2}})
    params['upflow'] = upflow

    L = input_length
    lw = lambda k: (jax.random.normal(k, (L, L), jnp.float32)
                    / jnp.sqrt(float(L))).astype(jnp.bfloat16)
    lb = lambda k: jax.random.normal(k, (1, L), jnp.float32) * 0.1
    params['fc_mu_wt'] = lw(next(keys))       # stored transposed: (L_in, L_out)
    params['fc_mu_b'] = lb(next(keys))
    params['fc_var_wt'] = lw(next(keys))
    params['fc_var_b'] = lb(next(keys))
    return params


# ----------------------------------------------------------------------------
# Forward-pass glue — channel-first (B, C, L); matches reverse=False control flow.
# ----------------------------------------------------------------------------
def flip_channels(x):           # torch.flip(x, [1]) — reverse the channel axis
    return x[:, ::-1, :]


def coupling_block_fwd(x, layer_params, *, ks, dr, nl):
    # ResidualCouplingBlock: 4 x (ResidualCouplingLayer(mean_only=True), Flip)
    half = x.shape[1] // 2
    for p in layer_params:
        x0, x1 = x[:, :half, :], x[:, half:, :]
        x1 = wn_stack(x0, p, kernel_size=ks, dilation_rate=dr, n_layers=nl,
                      add=x1)                  # fused: x1 = m + x1 (logs == 0)
        x = flip_channels(jnp.concatenate([x0, x1], axis=1))
    return x


def hierarchy_flow_fwd(x, p, *, ks, dr, nl):
    # Reverse_Hierarchy_flow, reverse=False
    half = x.shape[1] // 2
    x0, x1 = x[:, :half, :], x[:, half:, :]
    L = int(x1.shape[2])
    s1 = wn_stack(x0, p['wn1'], kernel_size=ks, dilation_rate=dr, n_layers=nl)
    s2 = wn_stack(x0, p['wn2'], kernel_size=ks, dilation_rate=dr, n_layers=nl)
    s = jnp.concatenate([s1, s2], axis=2)      # concat along the length axis
    now = 0
    for i in range(L.bit_length()):
        a = s[:, :, now:now + (1 << i)]
        now += (1 << i)
        x1 = x1 + jnp.repeat(a, L // (1 << i), axis=2)   # repeat_interleave
    return jnp.concatenate([x0, x1], axis=1)


def upsample_layer_fwd(x, sf, p, *, ks, dr, nl):
    # ResidualUpsampleCouplingLayer, reverse=False
    half = x.shape[1] // 2
    x0, x1 = x[:, :half, :], x[:, half:, :]
    s1 = wn_stack(x0, p['wn0'], kernel_size=ks, dilation_rate=dr, n_layers=nl)
    up_x1 = jnp.repeat(x1, sf, axis=2) + jnp.repeat(s1, sf, axis=2)
    up_x0 = wn_stack(up_x1, p['wn1'], kernel_size=ks, dilation_rate=dr,
                     n_layers=nl, add=jnp.repeat(x0, sf, axis=2))  # fused add
    return jnp.concatenate([up_x0, up_x1], axis=1)


def upflow_fwd(x, upflow_params, sf, *, ks, dr, nl):
    # ResidualUpsampleCouplingBlock, reverse=False, unet_pyramid=None
    pyramid = []
    for p in upflow_params:
        pyramid.append(x)
        x = flip_channels(upsample_layer_fwd(x, sf, p['up'], ks=ks, dr=dr, nl=nl))
        # ResidualCouplingHierarchyBlock(n_flows=1): [Reverse_Hierarchy_flow, Flip]
        x = flip_channels(hierarchy_flow_fwd(x, p['hier'], ks=ks, dr=dr, nl=nl))
    pyramid.append(x)
    return x, tuple(pyramid)


def flow_generator_forward(params, x, eps_key, *, ks, dr, nl, sf):
    """x: (B, inter_channels, input_length) — same NCL layout as the module."""
    z = coupling_block_fwd(x, params['flow1'], ks=ks, dr=dr, nl=nl)
    eps = jax.random.uniform(eps_key, z.shape, z.dtype)     # torch.rand_like (uniform)
    mu, log_var, z = fc_reparam(z, eps, params['fc_mu_wt'], params['fc_mu_b'],
                                params['fc_var_wt'], params['fc_var_b'])
    z_norm = z
    z = coupling_block_fwd(z, params['flow2'], ks=ks, dr=dr, nl=nl)
    z, flow_pyramid = upflow_fwd(z, params['upflow'], sf, ks=ks, dr=dr, nl=nl)
    return z, z_norm, mu, log_var, flow_pyramid


# ----------------------------------------------------------------------------
if __name__ == "__main__":
    # Small, module-consistent config.  input_length must be a power of two
    # (the hierarchy flow implicitly requires it); 128 keeps the lane axis aligned.
    inter_channels = 4
    hidden_channels = 32
    kernel_size = 3
    scale_factor = 2
    dilation_rate = 2
    n_layers = 2
    n_uplayers = 1
    input_length = 128
    B = 2
    half = inter_channels // 2

    key = jax.random.PRNGKey(0)
    pkey, xkey, ekey, ck0, ck1, ck2, ck3 = jax.random.split(key, 7)

    params = init_flow_generator(pkey, inter_channels, hidden_channels,
                                 kernel_size, scale_factor, dilation_rate,
                                 n_layers, n_uplayers, input_length)
    x = jax.random.normal(xkey, (B, inter_channels, input_length), jnp.float32)

    # ---- kernel-vs-reference numerics check (NON-zero post weights + fused add) ----
    p_chk = make_wn_params(ck0, half, half, hidden_channels, kernel_size,
                           n_layers, zero_post=False)
    x_chk = jax.random.normal(ck1, (B, half, input_length), jnp.float32)
    a_chk = jax.random.normal(ck2, (B, half, input_length), jnp.float32)
    got = wn_stack(x_chk, p_chk, kernel_size=kernel_size,
                   dilation_rate=dilation_rate, n_layers=n_layers, add=a_chk)
    want = wn_stack_ref(x_chk, p_chk, kernel_size=kernel_size,
                        dilation_rate=dilation_rate, n_layers=n_layers, add=a_chk)
    assert jnp.allclose(got, want, atol=1e-2, rtol=1e-2), \
        float(jnp.max(jnp.abs(got - want)))

    z_chk = jax.random.normal(ck3, (B, inter_channels, input_length), jnp.float32)
    e_chk = jax.random.uniform(jax.random.PRNGKey(1), z_chk.shape, jnp.float32)
    got3 = fc_reparam(z_chk, e_chk, params['fc_mu_wt'], params['fc_mu_b'],
                      params['fc_var_wt'], params['fc_var_b'])
    want3 = fc_reparam_ref(z_chk, e_chk, params['fc_mu_wt'], params['fc_mu_b'],
                           params['fc_var_wt'], params['fc_var_b'])
    for g, w in zip(got3, want3):
        assert jnp.allclose(g, w, atol=1e-2, rtol=1e-2), \
            float(jnp.max(jnp.abs(g - w)))

    # ---- full FlowGenerator forward ----
    fwd = jax.jit(functools.partial(flow_generator_forward,
                                    ks=kernel_size, dr=dilation_rate,
                                    nl=n_layers, sf=scale_factor))
    z, z_norm, mu, log_var, flow_pyramid = fwd(params, x, ekey)
    jax.block_until_ready((z, z_norm, mu, log_var, flow_pyramid))

    out_len = input_length * scale_factor ** n_uplayers
    assert z.shape == (B, inter_channels, out_len)
    assert z_norm.shape == (B, inter_channels, input_length)
    assert mu.shape == (B, inter_channels, input_length)
    assert log_var.shape == (B, inter_channels, input_length)
    assert len(flow_pyramid) == n_uplayers + 1
    assert flow_pyramid[-1].shape == (B, inter_channels, out_len)
    print("KERNEL_OK")
</pallas_src>

<mosaic_0001>
module attributes {stable_mosaic.version = 11 : i64} {
  func.func @_wn_stack_kernel(%arg0: i32, %arg1: memref<1x2x128xf32, #tpu.memory_space<vmem>>, %arg2: memref<1x2x128xf32, #tpu.memory_space<vmem>>, %arg3: memref<32x2xbf16, #tpu.memory_space<vmem>>, %arg4: memref<32x1xf32, #tpu.memory_space<vmem>>, %arg5: memref<2x32x96xbf16, #tpu.memory_space<vmem>>, %arg6: memref<2x32x1xf32, #tpu.memory_space<vmem>>, %arg7: memref<2x32x96xbf16, #tpu.memory_space<vmem>>, %arg8: memref<2x32x1xf32, #tpu.memory_space<vmem>>, %arg9: memref<1x32x32xbf16, #tpu.memory_space<vmem>>, %arg10: memref<1x32x1xf32, #tpu.memory_space<vmem>>, %arg11: memref<2x32x32xbf16, #tpu.memory_space<vmem>>, %arg12: memref<2x32x1xf32, #tpu.memory_space<vmem>>, %arg13: memref<2x32xbf16, #tpu.memory_space<vmem>>, %arg14: memref<2x1xf32, #tpu.memory_space<vmem>>, %arg15: memref<1x2x128xf32, #tpu.memory_space<vmem>>) attributes {dimension_semantics = [#tpu.dimension_semantics<parallel>], iteration_bounds = array<i64: 2>, scalar_prefetch = 0 : i64, scratch_operands = 0 : i64, tpu.core_type = #tpu.core_type<tc>, window_params = [{transform_indices = @transform_0, window_bounds = array<i64: 1, 2, 128>}, {transform_indices = @transform_1, window_bounds = array<i64: 1, 2, 128>}, {pipeline_mode = #tpu.pipeline_mode<synchronous>, transform_indices = @transform_2, window_bounds = array<i64: 32, 2>}, {pipeline_mode = #tpu.pipeline_mode<synchronous>, transform_indices = @transform_3, window_bounds = array<i64: 32, 1>}, {pipeline_mode = #tpu.pipeline_mode<synchronous>, transform_indices = @transform_4, window_bounds = array<i64: 2, 32, 96>}, {pipeline_mode = #tpu.pipeline_mode<synchronous>, transform_indices = @transform_5, window_bounds = array<i64: 2, 32, 1>}, {pipeline_mode = #tpu.pipeline_mode<synchronous>, transform_indices = @transform_6, window_bounds = array<i64: 2, 32, 96>}, {pipeline_mode = #tpu.pipeline_mode<synchronous>, transform_indices = @transform_7, window_bounds = array<i64: 2, 32, 1>}, {pipeline_mode = #tpu.pipeline_mode<synchronous>, transform_indices = @transform_8, window_bounds = array<i64: 1, 32, 32>}, {pipeline_mode = #tpu.pipeline_mode<synchronous>, transform_indices = @transform_9, window_bounds = array<i64: 1, 32, 1>}, {pipeline_mode = #tpu.pipeline_mode<synchronous>, transform_indices = @transform_10, window_bounds = array<i64: 2, 32, 32>}, {pipeline_mode = #tpu.pipeline_mode<synchronous>, transform_indices = @transform_11, window_bounds = array<i64: 2, 32, 1>}, {pipeline_mode = #tpu.pipeline_mode<synchronous>, transform_indices = @transform_12, window_bounds = array<i64: 2, 32>}, {pipeline_mode = #tpu.pipeline_mode<synchronous>, transform_indices = @transform_13, window_bounds = array<i64: 2, 1>}, {transform_indices = @transform_14, window_bounds = array<i64: 1, 2, 128>}]} {
    %0 = tpu.iota {dimensions = array<i32: 1>} : vector<1x128xi32>
    %c0 = arith.constant 0 : index
    %c0_0 = arith.constant 0 : index
    %1 = vector.load %arg3[%c0, %c0_0] : memref<32x2xbf16, #tpu.memory_space<vmem>>, vector<32x2xbf16>
    %c0_1 = arith.constant 0 : index
    %c0_2 = arith.constant 0 : index
    %c0_3 = arith.constant 0 : index
    %2 = vector.load %arg1[%c0_1, %c0_2, %c0_3] : memref<1x2x128xf32, #tpu.memory_space<vmem>>, vector<1x2x128xf32>
    %3 = vector.shape_cast %2 : vector<1x2x128xf32> to vector<2x128xf32>
    %4 = arith.truncf %3 : vector<2x128xf32> to vector<2x128xbf16>
    %cst = arith.constant dense<0.000000e+00> : vector<32x128xf32>
    %5 = tpu.matmul %1, %4, %cst {dimension_numbers = #tpu.dot_dimension_numbers<[1], [0], [0], [1], [0, 0, 1, 1], [], []>} : vector<32x2xbf16>, vector<2x128xbf16>, vector<32x128xf32> -> vector<32x128xf32>
    %c0_4 = arith.constant 0 : index
    %c0_5 = arith.constant 0 : index
    %6 = vector.load %arg4[%c0_4, %c0_5] : memref<32x1xf32, #tpu.memory_space<vmem>>, vector<32x1xf32>
    %7 = vector.broadcast %6 : vector<32x1xf32> to vector<32x128xf32>
    %8 = arith.addf %5, %7 : vector<32x128xf32>
    %cst_6 = arith.constant 0.000000e+00 : f32
    %9 = vector.broadcast %cst_6 : f32 to vector<32x128xf32>
    %c1_i32 = arith.constant 1 : i32
    %10 = tpu.dynamic_rotate %8 by %c1_i32 dim 1 : vector<32x128xf32>, i32 -> vector<32x128xf32>
    %c1_i32_7 = arith.constant 1 : i32
    %11 = vector.broadcast %c1_i32_7 : i32 to vector<1x128xi32>
    %12 = arith.cmpi sge, %0, %11 : vector<1x128xi32>
    %cst_8 = arith.constant 0.000000e+00 : f32
    %13 = vector.shape_cast %12 : vector<1x128xi1> to vector<1x128xi1>
    %14 = vector.broadcast %13 : vector<1x128xi1> to vector<32x128xi1>
    %15 = vector.broadcast %cst_8 : f32 to vector<32x128xf32>
    %16 = arith.select %14, %10, %15 : vector<32x128xi1>, vector<32x128xf32>
    %c127_i32 = arith.constant 127 : i32
    %17 = tpu.dynamic_rotate %8 by %c127_i32 dim 1 : vector<32x128xf32>, i32 -> vector<32x128xf32>
    %c127_i32_9 = arith.constant 127 : i32
    %18 = vector.broadcast %c127_i32_9 : i32 to vector<1x128xi32>
    %19 = arith.cmpi slt, %0, %18 : vector<1x128xi32>
    %cst_10 = arith.constant 0.000000e+00 : f32
    %20 = vector.shape_cast %19 : vector<1x128xi1> to vector<1x128xi1>
    %21 = vector.broadcast %20 : vector<1x128xi1> to vector<32x128xi1>
    %22 = vector.broadcast %cst_10 : f32 to vector<32x128xf32>
    %23 = arith.select %21, %17, %22 : vector<32x128xi1>, vector<32x128xf32>
    %24 = tpu.concatenate %16, %8, %23 in 0 : vector<32x128xf32>, vector<32x128xf32>, vector<32x128xf32> -> vector<96x128xf32>
    %25 = arith.truncf %24 : vector<96x128xf32> to vector<96x128xbf16>
    %c0_11 = arith.constant 0 : index
    %c0_12 = arith.constant 0 : index
    %c0_13 = arith.constant 0 : index
    %26 = vector.load %arg5[%c0_11, %c0_12, %c0_13] : memref<2x32x96xbf16, #tpu.memory_space<vmem>>, vector<1x32x96xbf16>
    %27 = vector.shape_cast %26 : vector<1x32x96xbf16> to vector<32x96xbf16>
    %cst_14 = arith.constant dense<0.000000e+00> : vector<32x128xf32>
    %28 = tpu.matmul %27, %25, %cst_14 {dimension_numbers = #tpu.dot_dimension_numbers<[1], [0], [0], [1], [0, 0, 1, 1], [], []>} : vector<32x96xbf16>, vector<96x128xbf16>, vector<32x128xf32> -> vector<32x128xf32>
    %c0_15 = arith.constant 0 : index
    %c0_16 = arith.constant 0 : index
    %c0_17 = arith.constant 0 : index
    %29 = vector.load %arg6[%c0_15, %c0_16, %c0_17] : memref<2x32x1xf32, #tpu.memory_space<vmem>>, vector<1x32x1xf32>
    %30 = vector.shape_cast %29 : vector<1x32x1xf32> to vector<32x1xf32>
    %31 = vector.broadcast %30 : vector<32x1xf32> to vector<32x128xf32>
    %32 = arith.addf %28, %31 : vector<32x128xf32>
    %c0_18 = arith.constant 0 : index
    %c0_19 = arith.constant 0 : index
    %c0_20 = arith.constant 0 : index
    %33 = vector.load %arg7[%c0_18, %c0_19, %c0_20] : memref<2x32x96xbf16, #tpu.memory_space<vmem>>, vector<1x32x96xbf16>
    %34 = vector.shape_cast %33 : vector<1x32x96xbf16> to vector<32x96xbf16>
    %cst_21 = arith.constant dense<0.000000e+00> : vector<32x128xf32>
    %35 = tpu.matmul %34, %25, %cst_21 {dimension_numbers = #tpu.dot_dimension_numbers<[1], [0], [0], [1], [0, 0, 1, 1], [], []>} : vector<32x96xbf16>, vector<96x128xbf16>, vector<32x128xf32> -> vector<32x128xf32>
    %c0_22 = arith.constant 0 : index
    %c0_23 = arith.constant 0 : index
    %c0_24 = arith.constant 0 : index
    %36 = vector.load %arg8[%c0_22, %c0_23, %c0_24] : memref<2x32x1xf32, #tpu.memory_space<vmem>>, vector<1x32x1xf32>
    %37 = vector.shape_cast %36 : vector<1x32x1xf32> to vector<32x1xf32>
    %38 = vector.broadcast %37 : vector<32x1xf32> to vector<32x128xf32>
    %39 = arith.addf %35, %38 : vector<32x128xf32>
    %40 = math.tanh %32 : vector<32x128xf32>
    %41 = arith.negf %39 : vector<32x128xf32>
    %42 = math.exp %41 : vector<32x128xf32>
    %cst_25 = arith.constant 1.000000e+00 : f32
    %43 = vector.broadcast %cst_25 : f32 to vector<32x128xf32>
    %44 = arith.addf %43, %42 : vector<32x128xf32>
    %45 = arith.divf %43, %44 : vector<32x128xf32>
    %46 = arith.mulf %40, %45 : vector<32x128xf32>
    %47 = arith.truncf %46 : vector<32x128xf32> to vector<32x128xbf16>
    %c0_26 = arith.constant 0 : index
    %c0_27 = arith.constant 0 : index
    %c0_28 = arith.constant 0 : index
    %48 = vector.load %arg9[%c0_26, %c0_27, %c0_28] : memref<1x32x32xbf16, #tpu.memory_space<vmem>>, vector<1x32x32xbf16>
    %49 = vector.shape_cast %48 : vector<1x32x32xbf16> to vector<32x32xbf16>
    %cst_29 = arith.constant dense<0.000000e+00> : vector<32x128xf32>
    %50 = tpu.matmul %49, %47, %cst_29 {dimension_numbers = #tpu.dot_dimension_numbers<[1], [0], [0], [1], [0, 0, 1, 1], [], []>} : vector<32x32xbf16>, vector<32x128xbf16>, vector<32x128xf32> -> vector<32x128xf32>
    %51 = arith.addf %8, %50 : vector<32x128xf32>
    %c0_30 = arith.constant 0 : index
    %c0_31 = arith.constant 0 : index
    %c0_32 = arith.constant 0 : index
    %52 = vector.load %arg10[%c0_30, %c0_31, %c0_32] : memref<1x32x1xf32, #tpu.memory_space<vmem>>, vector<1x32x1xf32>
    %53 = vector.shape_cast %52 : vector<1x32x1xf32> to vector<32x1xf32>
    %54 = vector.broadcast %53 : vector<32x1xf32> to vector<32x128xf32>
    %55 = arith.addf %51, %54 : vector<32x128xf32>
    %c0_33 = arith.constant 0 : index
    %c0_34 = arith.constant 0 : index
    %c0_35 = arith.constant 0 : index
    %56 = vector.load %arg11[%c0_33, %c0_34, %c0_35] : memref<2x32x32xbf16, #tpu.memory_space<vmem>>, vector<1x32x32xbf16>
    %57 = vector.shape_cast %56 : vector<1x32x32xbf16> to vector<32x32xbf16>
    %cst_36 = arith.constant dense<0.000000e+00> : vector<32x128xf32>
    %58 = tpu.matmul %57, %47, %cst_36 {dimension_numbers = #tpu.dot_dimension_numbers<[1], [0], [0], [1], [0, 0, 1, 1], [], []>} : vector<32x32xbf16>, vector<32x128xbf16>, vector<32x128xf32> -> vector<32x128xf32>
    %59 = arith.addf %9, %58 : vector<32x128xf32>
    %c0_37 = arith.constant 0 : index
    %c0_38 = arith.constant 0 : index
    %c0_39 = arith.constant 0 : index
    %60 = vector.load %arg12[%c0_37, %c0_38, %c0_39] : memref<2x32x1xf32, #tpu.memory_space<vmem>>, vector<1x32x1xf32>
    %61 = vector.shape_cast %60 : vector<1x32x1xf32> to vector<32x1xf32>
    %62 = vector.broadcast %61 : vector<32x1xf32> to vector<32x128xf32>
    %63 = arith.addf %59, %62 : vector<32x128xf32>
    %c2_i32 = arith.constant 2 : i32
    %64 = tpu.dynamic_rotate %55 by %c2_i32 dim 1 : vector<32x128xf32>, i32 -> vector<32x128xf32>
    %c2_i32_40 = arith.constant 2 : i32
    %65 = vector.broadcast %c2_i32_40 : i32 to vector<1x128xi32>
    %66 = arith.cmpi sge, %0, %65 : vector<1x128xi32>
    %cst_41 = arith.constant 0.000000e+00 : f32
    %67 = vector.shape_cast %66 : vector<1x128xi1> to vector<1x128xi1>
    %68 = vector.broadcast %67 : vector<1x128xi1> to vector<32x128xi1>
    %69 = vector.broadcast %cst_41 : f32 to vector<32x128xf32>
    %70 = arith.select %68, %64, %69 : vector<32x128xi1>, vector<32x128xf32>
    %c126_i32 = arith.constant 126 : i32
    %71 = tpu.dynamic_rotate %55 by %c126_i32 dim 1 : vector<32x128xf32>, i32 -> vector<32x128xf32>
    %c126_i32_42 = arith.constant 126 : i32
    %72 = vector.broadcast %c126_i32_42 : i32 to vector<1x128xi32>
    %73 = arith.cmpi slt, %0, %72 : vector<1x128xi32>
    %cst_43 = arith.constant 0.000000e+00 : f32
    %74 = vector.shape_cast %73 : vector<1x128xi1> to vector<1x128xi1>
    %75 = vector.broadcast %74 : vector<1x128xi1> to vector<32x128xi1>
    %76 = vector.broadcast %cst_43 : f32 to vector<32x128xf32>
    %77 = arith.select %75, %71, %76 : vector<32x128xi1>, vector<32x128xf32>
    %78 = tpu.concatenate %70, %55, %77 in 0 : vector<32x128xf32>, vector<32x128xf32>, vector<32x128xf32> -> vector<96x128xf32>
    %79 = arith.truncf %78 : vector<96x128xf32> to vector<96x128xbf16>
    %c1 = arith.constant 1 : index
    %c0_44 = arith.constant 0 : index
    %c0_45 = arith.constant 0 : index
    %80 = vector.load %arg5[%c1, %c0_44, %c0_45] : memref<2x32x96xbf16, #tpu.memory_space<vmem>>, vector<1x32x96xbf16>
    %81 = vector.shape_cast %80 : vector<1x32x96xbf16> to vector<32x96xbf16>
    %cst_46 = arith.constant dense<0.000000e+00> : vector<32x128xf32>
    %82 = tpu.matmul %81, %79, %cst_46 {dimension_numbers = #tpu.dot_dimension_numbers<[1], [0], [0], [1], [0, 0, 1, 1], [], []>} : vector<32x96xbf16>, vector<96x128xbf16>, vector<32x128xf32> -> vector<32x128xf32>
    %c1_47 = arith.constant 1 : index
    %c0_48 = arith.constant 0 : index
    %c0_49 = arith.constant 0 : index
    %83 = vector.load %arg6[%c1_47, %c0_48, %c0_49] : memref<2x32x1xf32, #tpu.memory_space<vmem>>, vector<1x32x1xf32>
    %84 = vector.shape_cast %83 : vector<1x32x1xf32> to vector<32x1xf32>
    %85 = vector.broadcast %84 : vector<32x1xf32> to vector<32x128xf32>
    %86 = arith.addf %82, %85 : vector<32x128xf32>
    %c1_50 = arith.constant 1 : index
    %c0_51 = arith.constant 0 : index
    %c0_52 = arith.constant 0 : index
    %87 = vector.load %arg7[%c1_50, %c0_51, %c0_52] : memref<2x32x96xbf16, #tpu.memory_space<vmem>>, vector<1x32x96xbf16>
    %88 = vector.shape_cast %87 : vector<1x32x96xbf16> to vector<32x96xbf16>
    %cst_53 = arith.constant dense<0.000000e+00> : vector<32x128xf32>
    %89 = tpu.matmul %88, %79, %cst_53 {dimension_numbers = #tpu.dot_dimension_numbers<[1], [0], [0], [1], [0, 0, 1, 1], [], []>} : vector<32x96xbf16>, vector<96x128xbf16>, vector<32x128xf32> -> vector<32x128xf32>
    %c1_54 = arith.constant 1 : index
    %c0_55 = arith.constant 0 : index
    %c0_56 = arith.constant 0 : index
    %90 = vector.load %arg8[%c1_54, %c0_55, %c0_56] : memref<2x32x1xf32, #tpu.memory_space<vmem>>, vector<1x32x1xf32>
    %91 = vector.shape_cast %90 : vector<1x32x1xf32> to vector<32x1xf32>
    %92 = vector.broadcast %91 : vector<32x1xf32> to vector<32x128xf32>
    %93 = arith.addf %89, %92 : vector<32x128xf32>
    %94 = math.tanh %86 : vector<32x128xf32>
    %95 = arith.negf %93 : vector<32x128xf32>
    %96 = math.exp %95 : vector<32x128xf32>
    %cst_57 = arith.constant 1.000000e+00 : f32
    %97 = vector.broadcast %cst_57 : f32 to vector<32x128xf32>
    %98 = arith.addf %97, %96 : vector<32x128xf32>
    %99 = arith.divf %97, %98 : vector<32x128xf32>
    %100 = arith.mulf %94, %99 : vector<32x128xf32>
    %101 = arith.truncf %100 : vector<32x128xf32> to vector<32x128xbf16>
    %c1_58 = arith.constant 1 : index
    %c0_59 = arith.constant 0 : index
    %c0_60 = arith.constant 0 : index
    %102 = vector.load %arg11[%c1_58, %c0_59, %c0_60] : memref<2x32x32xbf16, #tpu.memory_space<vmem>>, vector<1x32x32xbf16>
    %103 = vector.shape_cast %102 : vector<1x32x32xbf16> to vector<32x32xbf16>
    %cst_61 = arith.constant dense<0.000000e+00> : vector<32x128xf32>
    %104 = tpu.matmul %103, %101, %cst_61 {dimension_numbers = #tpu.dot_dimension_numbers<[1], [0], [0], [1], [0, 0, 1, 1], [], []>} : vector<32x32xbf16>, vector<32x128xbf16>, vector<32x128xf32> -> vector<32x128xf32>
    %105 = arith.addf %63, %104 : vector<32x128xf32>
    %c1_62 = arith.constant 1 : index
    %c0_63 = arith.constant 0 : index
    %c0_64 = arith.constant 0 : index
    %106 = vector.load %arg12[%c1_62, %c0_63, %c0_64] : memref<2x32x1xf32, #tpu.memory_space<vmem>>, vector<1x32x1xf32>
    %107 = vector.shape_cast %106 : vector<1x32x1xf32> to vector<32x1xf32>
    %108 = vector.broadcast %107 : vector<32x1xf32> to vector<32x128xf32>
    %109 = arith.addf %105, %108 : vector<32x128xf32>
    %c0_65 = arith.constant 0 : index
    %c0_66 = arith.constant 0 : index
    %110 = vector.load %arg13[%c0_65, %c0_66] : memref<2x32xbf16, #tpu.memory_space<vmem>>, vector<2x32xbf16>
    %111 = arith.truncf %109 : vector<32x128xf32> to vector<32x128xbf16>
    %cst_67 = arith.constant dense<0.000000e+00> : vector<2x128xf32>
    %112 = tpu.matmul %110, %111, %cst_67 {dimension_numbers = #tpu.dot_dimension_numbers<[1], [0], [0], [1], [0, 0, 1, 1], [], []>} : vector<2x32xbf16>, vector<32x128xbf16>, vector<2x128xf32> -> vector<2x128xf32>
    %c0_68 = arith.constant 0 : index
    %c0_69 = arith.constant 0 : index
    %113 = vector.load %arg14[%c0_68, %c0_69] : memref<2x1xf32, #tpu.memory_space<vmem>>, vector<2x1xf32>
    %114 = vector.broadcast %113 : vector<2x1xf32> to vector<2x128xf32>
    %115 = arith.addf %112, %114 : vector<2x128xf32>
    %c0_70 = arith.constant 0 : index
    %c0_71 = arith.constant 0 : index
    %c0_72 = arith.constant 0 : index
    %116 = vector.load %arg2[%c0_70, %c0_71, %c0_72] : memref<1x2x128xf32, #tpu.memory_space<vmem>>, vector<1x2x128xf32>
    %117 = vector.shape_cast %116 : vector<1x2x128xf32> to vector<2x128xf32>
    %118 = arith.addf %115, %117 : vector<2x128xf32>
    %c0_73 = arith.constant 0 : index
    %c0_74 = arith.constant 0 : index
    %c0_75 = arith.constant 0 : index
    %119 = vector.load %arg15[%c0_73, %c0_74, %c0_75] : memref<1x2x128xf32, #tpu.memory_space<vmem>>, vector<1x2x128xf32>
    %120 = vector.shape_cast %119 : vector<1x2x128xf32> to vector<2x128xf32>
    %121 = vector.shape_cast %118 : vector<2x128xf32> to vector<1x2x128xf32>
    tpu.vector_store %arg15[%c0_73, %c0_74, %c0_75], %121 {strides = array<i32>} : memref<1x2x128xf32, #tpu.memory_space<vmem>>, vector<1x2x128xf32>,
    return
  }
  func.func @transform_0(%arg0: i32) -> (i32, i32, i32) {
    %c0_i32 = arith.constant 0 : i32
    %c0_i32_0 = arith.constant 0 : i32
    %c0_i32_1 = arith.constant 0 : i32
    return %arg0, %c0_i32, %c0_i32_0 : i32, i32, i32
  }
  func.func @transform_1(%arg0: i32) -> (i32, i32, i32) {
    %c0_i32 = arith.constant 0 : i32
    %c0_i32_0 = arith.constant 0 : i32
    %c0_i32_1 = arith.constant 0 : i32
    return %arg0, %c0_i32, %c0_i32_0 : i32, i32, i32
  }
  func.func @transform_2(%arg0: i32) -> (i32, i32) {
    %c0_i32 = arith.constant 0 : i32
    %c0_i32_0 = arith.constant 0 : i32
    %c0_i32_1 = arith.constant 0 : i32
    return %c0_i32, %c0_i32_0 : i32, i32
  }
  func.func @transform_3(%arg0: i32) -> (i32, i32) {
    %c0_i32 = arith.constant 0 : i32
    %c0_i32_0 = arith.constant 0 : i32
    %c0_i32_1 = arith.constant 0 : i32
    return %c0_i32, %c0_i32_0 : i32, i32
  }
  func.func @transform_4(%arg0: i32) -> (i32, i32, i32) {
    %c0_i32 = arith.constant 0 : i32
    %c0_i32_0 = arith.constant 0 : i32
    %c0_i32_1 = arith.constant 0 : i32
    %c0_i32_2 = arith.constant 0 : i32
    return %c0_i32, %c0_i32_0, %c0_i32_1 : i32, i32, i32
  }
  func.func @transform_5(%arg0: i32) -> (i32, i32, i32) {
    %c0_i32 = arith.constant 0 : i32
    %c0_i32_0 = arith.constant 0 : i32
    %c0_i32_1 = arith.constant 0 : i32
    %c0_i32_2 = arith.constant 0 : i32
    return %c0_i32, %c0_i32_0, %c0_i32_1 : i32, i32, i32
  }
  func.func @transform_6(%arg0: i32) -> (i32, i32, i32) {
    %c0_i32 = arith.constant 0 : i32
    %c0_i32_0 = arith.constant 0 : i32
    %c0_i32_1 = arith.constant 0 : i32
    %c0_i32_2 = arith.constant 0 : i32
    return %c0_i32, %c0_i32_0, %c0_i32_1 : i32, i32, i32
  }
  func.func @transform_7(%arg0: i32) -> (i32, i32, i32) {
    %c0_i32 = arith.constant 0 : i32
    %c0_i32_0 = arith.constant 0 : i32
    %c0_i32_1 = arith.constant 0 : i32
    %c0_i32_2 = arith.constant 0 : i32
    return %c0_i32, %c0_i32_0, %c0_i32_1 : i32, i32, i32
  }
  func.func @transform_8(%arg0: i32) -> (i32, i32, i32) {
    %c0_i32 = arith.constant 0 : i32
    %c0_i32_0 = arith.constant 0 : i32
    %c0_i32_1 = arith.constant 0 : i32
    %c0_i32_2 = arith.constant 0 : i32
    return %c0_i32, %c0_i32_0, %c0_i32_1 : i32, i32, i32
  }
  func.func @transform_9(%arg0: i32) -> (i32, i32, i32) {
    %c0_i32 = arith.constant 0 : i32
    %c0_i32_0 = arith.constant 0 : i32
    %c0_i32_1 = arith.constant 0 : i32
    %c0_i32_2 = arith.constant 0 : i32
    return %c0_i32, %c0_i32_0, %c0_i32_1 : i32, i32, i32
  }
  func.func @transform_10(%arg0: i32) -> (i32, i32, i32) {
    %c0_i32 = arith.constant 0 : i32
    %c0_i32_0 = arith.constant 0 : i32
    %c0_i32_1 = arith.constant 0 : i32
    %c0_i32_2 = arith.constant 0 : i32
    return %c0_i32, %c0_i32_0, %c0_i32_1 : i32, i32, i32
  }
  func.func @transform_11(%arg0: i32) -> (i32, i32, i32) {
    %c0_i32 = arith.constant 0 : i32
    %c0_i32_0 = arith.constant 0 : i32
    %c0_i32_1 = arith.constant 0 : i32
    %c0_i32_2 = arith.constant 0 : i32
    return %c0_i32, %c0_i32_0, %c0_i32_1 : i32, i32, i32
  }
  func.func @transform_12(%arg0: i32) -> (i32, i32) {
    %c0_i32 = arith.constant 0 : i32
    %c0_i32_0 = arith.constant 0 : i32
    %c0_i32_1 = arith.constant 0 : i32
    return %c0_i32, %c0_i32_0 : i32, i32
  }
  func.func @transform_13(%arg0: i32) -> (i32, i32) {
    %c0_i32 = arith.constant 0 : i32
    %c0_i32_0 = arith.constant 0 : i32
    %c0_i32_1 = arith.constant 0 : i32
    return %c0_i32, %c0_i32_0 : i32, i32
  }
  func.func @transform_14(%arg0: i32) -> (i32, i32, i32) {
    %c0_i32 = arith.constant 0 : i32
    %c0_i32_0 = arith.constant 0 : i32
    %c0_i32_1 = arith.constant 0 : i32
    return %arg0, %c0_i32, %c0_i32_0 : i32, i32, i32
  }
}

</mosaic_0001>

<llo_original>
// kernel: tpu_custom_call.1
$region0: #{tpu_custom_call.1}
  #allocation0 [shape = 'u32[]', space=smem, size = 0x4, offset = 0x4, fixed_abs, tag = 'smem constant byte address 0x4 - core index']
  #allocation1 [shape = 'u32[72,128]{1,0:T(1,128)}', space=vmem, size = 0x9000, scoped, tag = 'internal scratch']
  %s0 = inlined_call_operand.vmem [shape: f32[2,2,128], index: 0, kind: input, shape index: {}]
  %s1 = inlined_call_operand.vmem [shape: f32[2,2,128], index: 1, kind: input, shape index: {}]
  %s2 = inlined_call_operand.vmem [shape: bf16[32,2], index: 2, kind: input, shape index: {}]
  %s3 = inlined_call_operand.vmem [shape: f32[32,1], index: 3, kind: input, shape index: {}]
  %s4 = inlined_call_operand.vmem [shape: bf16[2,32,96], index: 4, kind: input, shape index: {}]
  %s5 = inlined_call_operand.vmem [shape: f32[2,32,1], index: 5, kind: input, shape index: {}]
  %s6 = inlined_call_operand.vmem [shape: bf16[2,32,96], index: 6, kind: input, shape index: {}]
  %s7 = inlined_call_operand.vmem [shape: f32[2,32,1], index: 7, kind: input, shape index: {}]
  %s8 = inlined_call_operand.vmem [shape: bf16[1,32,32], index: 8, kind: input, shape index: {}]
  %s9 = inlined_call_operand.vmem [shape: f32[1,32,1], index: 9, kind: input, shape index: {}]
  %s10 = inlined_call_operand.vmem [shape: bf16[2,32,32], index: 10, kind: input, shape index: {}]
  %s11 = inlined_call_operand.vmem [shape: f32[2,32,1], index: 11, kind: input, shape index: {}]
  %s12 = inlined_call_operand.vmem [shape: bf16[2,32], index: 12, kind: input, shape index: {}]
  %s13 = inlined_call_operand.vmem [shape: f32[2,1], index: 13, kind: input, shape index: {}]
  %s14 = inlined_call_operand.hbm [shape: f32[2,2,128], index: 14, kind: output, shape index: {}]
  %s15 = sld [smem:[#allocation0]]
  $region89: #{tpu_custom_call.1} parent=0
    _
  %s17 = ssub.s32 1, %s15
  %s18 = scalar_select 0, %s17, %s15
  $region1: #{tpu_custom_call.1} parent=0
    #allocation2 [shape = 'u8[2048]{0}', space=vmem, size = 0x800, scoped, tag = 'output window, operand 0']
    #allocation3 [shape = 's32[2]{0}', space=sflag, size = 0x8, scoped, tag = 'scoped memory for tpu_custom_call.1']
    %19 = vsyncpa [#allocation3], 0
    %s20 = scalar_lea.sflag [#allocation3], 1
    %21 = vsyncpa %s20, 0
    loop: start=0, step=1, limit=4
    $region2: #{tpu_custom_call.1} parent=1 // loop_pre_header
      _
    $region3: #{tpu_custom_call.1} parent=1 // loop_header
      %s23 = sphi 0, %s27
      %p24 = scmp.ge.s32.totalorder %s23, 4
      %s33 = sphi 0, %s35
      %s36 = sphi 0, %s33
      %s37 = sphi 0, %s36
      %s53 = sphi 0, %s37
      %s59 = sphi 0, %s61
      %s62 = sphi 0, %s59
      %s63 = sphi 0, %s62
      %s79 = sphi 0, %s63
      %s83 = sphi 0, %s83
      %s85 = sphi 0, %s83
      %s86 = sphi 0, %s85
      %s100 = sphi 0, %s86
      %s104 = sphi 0, %s104
      %s106 = sphi 0, %s104
      %s107 = sphi 0, %s106
      %s121 = sphi 0, %s107
      %s125 = sphi 0, %s125
      %s127 = sphi 0, %s125
      %s128 = sphi 0, %s127
      %s142 = sphi 0, %s128
      %s146 = sphi 0, %s146
      %s148 = sphi 0, %s146
      %s149 = sphi 0, %s148
      %s163 = sphi 0, %s149
      %s167 = sphi 0, %s167
      %s169 = sphi 0, %s167
      %s170 = sphi 0, %s169
      %s184 = sphi 0, %s170
      %s188 = sphi 0, %s188
      %s190 = sphi 0, %s188
      %s191 = sphi 0, %s190
      %s205 = sphi 0, %s191
      %s209 = sphi 0, %s209
      %s211 = sphi 0, %s209
      %s212 = sphi 0, %s211
      %s226 = sphi 0, %s212
      %s230 = sphi 0, %s230
      %s232 = sphi 0, %s230
      %s233 = sphi 0, %s232
      %s247 = sphi 0, %s233
      %s251 = sphi 0, %s251
      %s253 = sphi 0, %s251
      %s254 = sphi 0, %s253
      %s268 = sphi 0, %s254
      %s272 = sphi 0, %s272
      %s274 = sphi 0, %s272
      %s275 = sphi 0, %s274
      %s289 = sphi 0, %s275
      %s293 = sphi 0, %s293
      %s295 = sphi 0, %s293
      %s296 = sphi 0, %s295
      %s310 = sphi 0, %s296
      %s314 = sphi 0, %s314
      %s316 = sphi 0, %s314
      %s317 = sphi 0, %s316
      %s331 = sphi 0, %s317
      %s337 = sphi 0, %s339
      %s340 = sphi 0, %s337
      %s341 = sphi 0, %s340
      %s357 = sphi 0, %s341
    $region4: #{tpu_custom_call.1} parent=1 // loop_header_branch
      %26 = sbr.rel (%p24) target = $region8
    $region5: #{tpu_custom_call.1} parent=1 // loop_body
      %s28 = ssub.s32 %s23, 1
      %s29 = ssub.s32 %s23, 2
      %s30 = sadd.s32 %s23, 1
      %s31 = ssub.s32 %s23, %s30
      %p32 = scmp.eq.s32.totalorder %s31, 0
      %s34 = sadd.s32 %s33, 1
      %s35 = scalar_select %p32, %s33, %s34
      %p38 = pneg %p32
      %p39 = scmp.eq.s32.totalorder %s23, 1
      %p40 = por %p38, %p39
      %p41 = scmp.ne.s32.totalorder %s33, %s36
      %p42 = scmp.eq.s32.totalorder %s23, 0
      %p43 = por %p41, %p42
      %p44 = scmp.ne.s32.totalorder %s33, %s36
      %p45 = scmp.eq.s32.totalorder %s28, 1
      %p46 = por %p44, %p45
      %p47 = scmp.ne.s32.totalorder %s36, %s37
      %p48 = scmp.eq.s32.totalorder %s28, 0
      %p49 = por %p47, %p48
      %p50 = scmp.ne.s32.totalorder %s36, %s37
      %p51 = scmp.eq.s32.totalorder %s29, 1
      %p52 = por %p50, %p51
      %p54 = scmp.ne.s32.totalorder %s37, %s53
      %p55 = scmp.eq.s32.totalorder %s29, 0
      %p56 = por %p54, %p55
      %s57 = ssub.s32 %s23, %s30
      %p58 = scmp.eq.s32.totalorder %s57, 0
      %s60 = sadd.s32 %s59, 1
      %s61 = scalar_select %p58, %s59, %s60
      %p64 = pneg %p58
      %p65 = scmp.eq.s32.totalorder %s23, 1
      %p66 = por %p64, %p65
      %p67 = scmp.ne.s32.totalorder %s59, %s62
      %p68 = scmp.eq.s32.totalorder %s23, 0
      %p69 = por %p67, %p68
      %p70 = scmp.ne.s32.totalorder %s59, %s62
      %p71 = scmp.eq.s32.totalorder %s28, 1
      %p72 = por %p70, %p71
      %p73 = scmp.ne.s32.totalorder %s62, %s63
      %p74 = scmp.eq.s32.totalorder %s28, 0
      %p75 = por %p73, %p74
      %p76 = scmp.ne.s32.totalorder %s62, %s63
      %p77 = scmp.eq.s32.totalorder %s29, 1
      %p78 = por %p76, %p77
      %p80 = scmp.ne.s32.totalorder %s63, %s79
      %p81 = scmp.eq.s32.totalorder %s29, 0
      %p82 = por %p80, %p81
      %s84 = sadd.s32 %s83, 1
      %p87 = scmp.eq.s32.totalorder %s23, 1
      %p88 = scmp.ne.s32.totalorder %s83, %s85
      %p89 = scmp.eq.s32.totalorder %s23, 0
      %p90 = por %p88, %p89
      %p91 = scmp.ne.s32.totalorder %s83, %s85
      %p92 = scmp.eq.s32.totalorder %s28, 1
      %p93 = por %p91, %p92
      %p94 = scmp.ne.s32.totalorder %s85, %s86
      %p95 = scmp.eq.s32.totalorder %s28, 0
      %p96 = por %p94, %p95
      %p97 = scmp.ne.s32.totalorder %s85, %s86
      %p98 = scmp.eq.s32.totalorder %s29, 1
      %p99 = por %p97, %p98
      %p101 = scmp.ne.s32.totalorder %s86, %s100
      %p102 = scmp.eq.s32.totalorder %s29, 0
      %p103 = por %p101, %p102
      %s105 = sadd.s32 %s104, 1
      %p108 = scmp.eq.s32.totalorder %s23, 1
      %p109 = scmp.ne.s32.totalorder %s104, %s106
      %p110 = scmp.eq.s32.totalorder %s23, 0
      %p111 = por %p109, %p110
      %p112 = scmp.ne.s32.totalorder %s104, %s106
      %p113 = scmp.eq.s32.totalorder %s28, 1
      %p114 = por %p112, %p113
      %p115 = scmp.ne.s32.totalorder %s106, %s107
      %p116 = scmp.eq.s32.totalorder %s28, 0
      %p117 = por %p115, %p116
      %p118 = scmp.ne.s32.totalorder %s106, %s107
      %p119 = scmp.eq.s32.totalorder %s29, 1
      %p120 = por %p118, %p119
      %p122 = scmp.ne.s32.totalorder %s107, %s121
      %p123 = scmp.eq.s32.totalorder %s29, 0
      %p124 = por %p122, %p123
      %s126 = sadd.s32 %s125, 1
      %p129 = scmp.eq.s32.totalorder %s23, 1
      %p130 = scmp.ne.s32.totalorder %s125, %s127
      %p131 = scmp.eq.s32.totalorder %s23, 0
      %p132 = por %p130, %p131
      %p133 = scmp.ne.s32.totalorder %s125, %s127
      %p134 = scmp.eq.s32.totalorder %s28, 1
      %p135 = por %p133, %p134
      %p136 = scmp.ne.s32.totalorder %s127, %s128
      %p137 = scmp.eq.s32.totalorder %s28, 0
      %p138 = por %p136, %p137
      %p139 = scmp.ne.s32.totalorder %s127, %s128
      %p140 = scmp.eq.s32.totalorder %s29, 1
      %p141 = por %p139, %p140
      %p143 = scmp.ne.s32.totalorder %s128, %s142
      %p144 = scmp.eq.s32.totalorder %s29, 0
      %p145 = por %p143, %p144
      %s147 = sadd.s32 %s146, 1
      %p150 = scmp.eq.s32.totalorder %s23, 1
      %p151 = scmp.ne.s32.totalorder %s146, %s148
      %p152 = scmp.eq.s32.totalorder %s23, 0
      %p153 = por %p151, %p152
      %p154 = scmp.ne.s32.totalorder %s146, %s148
      %p155 = scmp.eq.s32.totalorder %s28, 1
      %p156 = por %p154, %p155
      %p157 = scmp.ne.s32.totalorder %s148, %s149
      %p158 = scmp.eq.s32.totalorder %s28, 0
      %p159 = por %p157, %p158
      %p160 = scmp.ne.s32.totalorder %s148, %s149
      %p161 = scmp.eq.s32.totalorder %s29, 1
      %p162 = por %p160, %p161
      %p164 = scmp.ne.s32.totalorder %s149, %s163
      %p165 = scmp.eq.s32.totalorder %s29, 0
      %p166 = por %p164, %p165
      %s168 = sadd.s32 %s167, 1
      %p171 = scmp.eq.s32.totalorder %s23, 1
      %p172 = scmp.ne.s32.totalorder %s167, %s169
      %p173 = scmp.eq.s32.totalorder %s23, 0
      %p174 = por %p172, %p173
      %p175 = scmp.ne.s32.totalorder %s167, %s169
      %p176 = scmp.eq.s32.totalorder %s28, 1
      %p177 = por %p175, %p176
      %p178 = scmp.ne.s32.totalorder %s169, %s170
      %p179 = scmp.eq.s32.totalorder %s28, 0
      %p180 = por %p178, %p179
      %p181 = scmp.ne.s32.totalorder %s169, %s170
      %p182 = scmp.eq.s32.totalorder %s29, 1
      %p183 = por %p181, %p182
      %p185 = scmp.ne.s32.totalorder %s170, %s184
      %p186 = scmp.eq.s32.totalorder %s29, 0
      %p187 = por %p185, %p186
      %s189 = sadd.s32 %s188, 1
      %p192 = scmp.eq.s32.totalorder %s23, 1
      %p193 = scmp.ne.s32.totalorder %s188, %s190
      %p194 = scmp.eq.s32.totalorder %s23, 0
      %p195 = por %p193, %p194
      %p196 = scmp.ne.s32.totalorder %s188, %s190
      %p197 = scmp.eq.s32.totalorder %s28, 1
      %p198 = por %p196, %p197
      %p199 = scmp.ne.s32.totalorder %s190, %s191
      %p200 = scmp.eq.s32.totalorder %s28, 0
      %p201 = por %p199, %p200
      %p202 = scmp.ne.s32.totalorder %s190, %s191
      %p203 = scmp.eq.s32.totalorder %s29, 1
      %p204 = por %p202, %p203
      %p206 = scmp.ne.s32.totalorder %s191, %s205
      %p207 = scmp.eq.s32.totalorder %s29, 0
      %p208 = por %p206, %p207
      %s210 = sadd.s32 %s209, 1
      %p213 = scmp.eq.s32.totalorder %s23, 1
      %p214 = scmp.ne.s32.totalorder %s209, %s211
      %p215 = scmp.eq.s32.totalorder %s23, 0
      %p216 = por %p214, %p215
      %p217 = scmp.ne.s32.totalorder %s209, %s211
      %p218 = scmp.eq.s32.totalorder %s28, 1
      %p219 = por %p217, %p218
      %p220 = scmp.ne.s32.totalorder %s211, %s212
      %p221 = scmp.eq.s32.totalorder %s28, 0
      %p222 = por %p220, %p221
      %p223 = scmp.ne.s32.totalorder %s211, %s212
      %p224 = scmp.eq.s32.totalorder %s29, 1
      %p225 = por %p223, %p224
      %p227 = scmp.ne.s32.totalorder %s212, %s226
      %p228 = scmp.eq.s32.totalorder %s29, 0
      %p229 = por %p227, %p228
      %s231 = sadd.s32 %s230, 1
      %p234 = scmp.eq.s32.totalorder %s23, 1
      %p235 = scmp.ne.s32.totalorder %s230, %s232
      %p236 = scmp.eq.s32.totalorder %s23, 0
      %p237 = por %p235, %p236
      %p238 = scmp.ne.s32.totalorder %s230, %s232
      %p239 = scmp.eq.s32.totalorder %s28, 1
      %p240 = por %p238, %p239
      %p241 = scmp.ne.s32.totalorder %s232, %s233
      %p242 = scmp.eq.s32.totalorder %s28, 0
      %p243 = por %p241, %p242
      %p244 = scmp.ne.s32.totalorder %s232, %s233
      %p245 = scmp.eq.s32.totalorder %s29, 1
      %p246 = por %p244, %p245
      %p248 = scmp.ne.s32.totalorder %s233, %s247
      %p249 = scmp.eq.s32.totalorder %s29, 0
      %p250 = por %p248, %p249
      %s252 = sadd.s32 %s251, 1
      %p255 = scmp.eq.s32.totalorder %s23, 1
      %p256 = scmp.ne.s32.totalorder %s251, %s253
      %p257 = scmp.eq.s32.totalorder %s23, 0
      %p258 = por %p256, %p257
      %p259 = scmp.ne.s32.totalorder %s251, %s253
      %p260 = scmp.eq.s32.totalorder %s28, 1
      %p261 = por %p259, %p260
      %p262 = scmp.ne.s32.totalorder %s253, %s254
      %p263 = scmp.eq.s32.totalorder %s28, 0
      %p264 = por %p262, %p263
      %p265 = scmp.ne.s32.totalorder %s253, %s254
      %p266 = scmp.eq.s32.totalorder %s29, 1
      %p267 = por %p265, %p266
      %p269 = scmp.ne.s32.totalorder %s254, %s268
      %p270 = scmp.eq.s32.totalorder %s29, 0
      %p271 = por %p269, %p270
      %s273 = sadd.s32 %s272, 1
      %p276 = scmp.eq.s32.totalorder %s23, 1
      %p277 = scmp.ne.s32.totalorder %s272, %s274
      %p278 = scmp.eq.s32.totalorder %s23, 0
      %p279 = por %p277, %p278
      %p280 = scmp.ne.s32.totalorder %s272, %s274
      %p281 = scmp.eq.s32.totalorder %s28, 1
      %p282 = por %p280, %p281
      %p283 = scmp.ne.s32.totalorder %s274, %s275
      %p284 = scmp.eq.s32.totalorder %s28, 0
      %p285 = por %p283, %p284
      %p286 = scmp.ne.s32.totalorder %s274, %s275
      %p287 = scmp.eq.s32.totalorder %s29, 1
      %p288 = por %p286, %p287
      %p290 = scmp.ne.s32.totalorder %s275, %s289
      %p291 = scmp.eq.s32.totalorder %s29, 0
      %p292 = por %p290, %p291
      %s294 = sadd.s32 %s293, 1
      %p297 = scmp.eq.s32.totalorder %s23, 1
      %p298 = scmp.ne.s32.totalorder %s293, %s295
      %p299 = scmp.eq.s32.totalorder %s23, 0
      %p300 = por %p298, %p299
      %p301 = scmp.ne.s32.totalorder %s293, %s295
      %p302 = scmp.eq.s32.totalorder %s28, 1
      %p303 = por %p301, %p302
      %p304 = scmp.ne.s32.totalorder %s295, %s296
      %p305 = scmp.eq.s32.totalorder %s28, 0
      %p306 = por %p304, %p305
      %p307 = scmp.ne.s32.totalorder %s295, %s296
      %p308 = scmp.eq.s32.totalorder %s29, 1
      %p309 = por %p307, %p308
      %p311 = scmp.ne.s32.totalorder %s296, %s310
      %p312 = scmp.eq.s32.totalorder %s29, 0
      %p313 = por %p311, %p312
      %s315 = sadd.s32 %s314, 1
      %p318 = scmp.eq.s32.totalorder %s23, 1
      %p319 = scmp.ne.s32.totalorder %s314, %s316
      %p320 = scmp.eq.s32.totalorder %s23, 0
      %p321 = por %p319, %p320
      %p322 = scmp.ne.s32.totalorder %s314, %s316
      %p323 = scmp.eq.s32.totalorder %s28, 1
      %p324 = por %p322, %p323
      %p325 = scmp.ne.s32.totalorder %s316, %s317
      %p326 = scmp.eq.s32.totalorder %s28, 0
      %p327 = por %p325, %p326
      %p328 = scmp.ne.s32.totalorder %s316, %s317
      %p329 = scmp.eq.s32.totalorder %s29, 1
      %p330 = por %p328, %p329
      %p332 = scmp.ne.s32.totalorder %s317, %s331
      %p333 = scmp.eq.s32.totalorder %s29, 0
      %p334 = por %p332, %p333
      %s335 = ssub.s32 %s23, %s30
      %p336 = scmp.eq.s32.totalorder %s335, 0
      %s338 = sadd.s32 %s337, 1
      %s339 = scalar_select %p336, %s337, %s338
      %p342 = pneg %p336
      %p343 = scmp.eq.s32.totalorder %s23, 1
      %p344 = por %p342, %p343
      %p345 = scmp.ne.s32.totalorder %s337, %s340
      %p346 = scmp.eq.s32.totalorder %s23, 0
      %p347 = por %p345, %p346
      %p348 = scmp.ne.s32.totalorder %s337, %s340
      %p349 = scmp.eq.s32.totalorder %s28, 1
      %p350 = por %p348, %p349
      %p351 = scmp.ne.s32.totalorder %s340, %s341
      %p352 = scmp.eq.s32.totalorder %s28, 0
      %p353 = por %p351, %p352
      %p354 = scmp.ne.s32.totalorder %s340, %s341
      %p355 = scmp.eq.s32.totalorder %s29, 1
      %p356 = por %p354, %p355
      %p358 = scmp.ne.s32.totalorder %s341, %s357
      %p359 = scmp.eq.s32.totalorder %s29, 0
      %p360 = por %p358, %p359
      %p361 = scmp.le.s32.totalorder 1, %s23
      %p362 = scmp.lt.s32.totalorder %s23, 3
      %p363 = pnand %p361, %p362
      %p364 = pneg %p363
      // Predicated region
      $region9: #{tpu_custom_call.1} parent=5 // pred_check
        _
      $region10: #{tpu_custom_call.1} parent=5 // pred_check_branch
        %366 = sbr.rel (%p363) target = $region12
      $region11: #{tpu_custom_call.1} parent=5 // pred_region
        %s367 = ssub.s32 %s23, 1
        // Predicated region
        $region13: #{tpu_custom_call.1} parent=11 // pred_check
          %p368 = pneg %p96
        $region14: #{tpu_custom_call.1} parent=11 // pred_check_branch
          %370 = sbr.rel (%p368) target = $region16
        $region15: #{tpu_custom_call.1} parent=11 // pred_region
          _
        $region16: #{tpu_custom_call.1} parent=11 // pred_fallthru
          _
        // Predicated region
        $region17: #{tpu_custom_call.1} parent=11 // pred_check
          %p371 = pneg %p117
        $region18: #{tpu_custom_call.1} parent=11 // pred_check_branch
          %373 = sbr.rel (%p371) target = $region20
        $region19: #{tpu_custom_call.1} parent=11 // pred_region
          _
        $region20: #{tpu_custom_call.1} parent=11 // pred_fallthru
          _
        // Predicated region
        $region21: #{tpu_custom_call.1} parent=11 // pred_check
          %p374 = pneg %p138
        $region22: #{tpu_custom_call.1} parent=11 // pred_check_branch
          %376 = sbr.rel (%p374) target = $region24
        $region23: #{tpu_custom_call.1} parent=11 // pred_region
          _
        $region24: #{tpu_custom_call.1} parent=11 // pred_fallthru
          _
        // Predicated region
        $region25: #{tpu_custom_call.1} parent=11 // pred_check
          %p377 = pneg %p159
        $region26: #{tpu_custom_call.1} parent=11 // pred_check_branch
          %379 = sbr.rel (%p377) target = $region28
        $region27: #{tpu_custom_call.1} parent=11 // pred_region
          _
        $region28: #{tpu_custom_call.1} parent=11 // pred_fallthru
          _
        // Predicated region
        $region29: #{tpu_custom_call.1} parent=11 // pred_check
          %p380 = pneg %p180
        $region30: #{tpu_custom_call.1} parent=11 // pred_check_branch
          %382 = sbr.rel (%p380) target = $region32
        $region31: #{tpu_custom_call.1} parent=11 // pred_region
          _
        $region32: #{tpu_custom_call.1} parent=11 // pred_fallthru
          _
        // Predicated region
        $region33: #{tpu_custom_call.1} parent=11 // pred_check
          %p383 = pneg %p201
        $region34: #{tpu_custom_call.1} parent=11 // pred_check_branch
          %385 = sbr.rel (%p383) target = $region36
        $region35: #{tpu_custom_call.1} parent=11 // pred_region
          _
        $region36: #{tpu_custom_call.1} parent=11 // pred_fallthru
          _
        // Predicated region
        $region37: #{tpu_custom_call.1} parent=11 // pred_check
          %p386 = pneg %p222
        $region38: #{tpu_custom_call.1} parent=11 // pred_check_branch
          %388 = sbr.rel (%p386) target = $region40
        $region39: #{tpu_custom_call.1} parent=11 // pred_region
          _
        $region40: #{tpu_custom_call.1} parent=11 // pred_fallthru
          _
        // Predicated region
        $region41: #{tpu_custom_call.1} parent=11 // pred_check
          %p389 = pneg %p243
        $region42: #{tpu_custom_call.1} parent=11 // pred_check_branch
          %391 = sbr.rel (%p389) target = $region44
        $region43: #{tpu_custom_call.1} parent=11 // pred_region
          _
        $region44: #{tpu_custom_call.1} parent=11 // pred_fallthru
          _
        // Predicated region
        $region45: #{tpu_custom_call.1} parent=11 // pred_check
          %p392 = pneg %p264
        $region46: #{tpu_custom_call.1} parent=11 // pred_check_branch
          %394 = sbr.rel (%p392) target = $region48
        $region47: #{tpu_custom_call.1} parent=11 // pred_region
          _
        $region48: #{tpu_custom_call.1} parent=11 // pred_fallthru
          _
        // Predicated region
        $region49: #{tpu_custom_call.1} parent=11 // pred_check
          %p395 = pneg %p285
        $region50: #{tpu_custom_call.1} parent=11 // pred_check_branch
          %397 = sbr.rel (%p395) target = $region52
        $region51: #{tpu_custom_call.1} parent=11 // pred_region
          _
        $region52: #{tpu_custom_call.1} parent=11 // pred_fallthru
          _
        // Predicated region
        $region53: #{tpu_custom_call.1} parent=11 // pred_check
          %p398 = pneg %p306
        $region54: #{tpu_custom_call.1} parent=11 // pred_check_branch
          %400 = sbr.rel (%p398) target = $region56
        $region55: #{tpu_custom_call.1} parent=11 // pred_region
          _
        $region56: #{tpu_custom_call.1} parent=11 // pred_fallthru
          _
        // Predicated region
        $region57: #{tpu_custom_call.1} parent=11 // pred_check
          %p401 = pneg %p327
        $region58: #{tpu_custom_call.1} parent=11 // pred_check_branch
          %403 = sbr.rel (%p401) target = $region60
        $region59: #{tpu_custom_call.1} parent=11 // pred_region
          _
        $region60: #{tpu_custom_call.1} parent=11 // pred_fallthru
          _
      $region12: #{tpu_custom_call.1} parent=5 // pred_fallthru
        _
      %p404 = scmp.lt.s32.totalorder %s23, 2
      // Predicated region
      $region61: #{tpu_custom_call.1} parent=5 // pred_check
        %p405 = pneg %p404
      $region62: #{tpu_custom_call.1} parent=5 // pred_check_branch
        %407 = sbr.rel (%p405) target = $region64
      $region63: #{tpu_custom_call.1} parent=5 // pred_region
        // Predicated region
        $region65: #{tpu_custom_call.1} parent=63 // pred_check
          %p408 = pneg %p43
        $region66: #{tpu_custom_call.1} parent=63 // pred_check_branch
          %410 = sbr.rel (%p408) target = $region68
        $region67: #{tpu_custom_call.1} parent=63 // pred_region
          %p411 = scmp.lt.s32.totalorder %s23, 1
          %s412 = scalar_select %p411, %s23, 1
          %s413 = smul.addr %s412, 2
          %s414 = scalar_lea.vmem %s0, %s413
        $region68: #{tpu_custom_call.1} parent=63 // pred_fallthru
          _
        // Predicated region
        $region69: #{tpu_custom_call.1} parent=63 // pred_check
          %p415 = pneg %p69
        $region70: #{tpu_custom_call.1} parent=63 // pred_check_branch
          %417 = sbr.rel (%p415) target = $region72
        $region71: #{tpu_custom_call.1} parent=63 // pred_region
          %p418 = scmp.lt.s32.totalorder %s23, 1
          %s419 = scalar_select %p418, %s23, 1
          %s420 = smul.addr %s419, 2
          %s421 = scalar_lea.vmem %s1, %s420
        $region72: #{tpu_custom_call.1} parent=63 // pred_fallthru
          _
      $region64: #{tpu_custom_call.1} parent=5 // pred_fallthru
        _
      %p422 = scmp.le.s32.totalorder 1, %s23
      %p423 = scmp.lt.s32.totalorder %s23, 3
      %p424 = pnand %p422, %p423
      %p425 = pneg %p424
      // Predicated region
      $region73: #{tpu_custom_call.1} parent=5 // pred_check
        _
      $region74: #{tpu_custom_call.1} parent=5 // pred_check_branch
        %427 = sbr.rel (%p424) target = $region76
      $region75: #{tpu_custom_call.1} parent=5 // pred_region
        %s428 = ssub.s32 %s23, 1
        %p429 = scmp.lt.s32.totalorder %s28, 1
        %s430 = scalar_select %p429, %s28, 1
        %s431 = smul.addr %s430, 2
        %s432 = scalar_lea.vmem %s0, %s431
        %p433 = pneg %p49
        %p434 = pneg %p46
        %p435 = scmp.lt.s32.totalorder %s28, 1
        %s436 = scalar_select %p435, %s28, 1
        %s437 = smul.addr %s436, 2
        %s438 = scalar_lea.vmem %s1, %s437
        %p439 = pneg %p75
        %p440 = pneg %p72
        %p441 = pneg %p96
        %p442 = pneg %p93
        %p443 = pneg %p117
        %p444 = pneg %p114
        %p445 = pneg %p138
        %p446 = pneg %p135
        %p447 = pneg %p159
        %p448 = pneg %p156
        %p449 = pneg %p180
        %p450 = pneg %p177
        %p451 = pneg %p201
        %p452 = pneg %p198
        %p453 = pneg %p222
        %p454 = pneg %p219
        %p455 = pneg %p243
        %p456 = pneg %p240
        %p457 = pneg %p264
        %p458 = pneg %p261
        %p459 = pneg %p285
        %p460 = pneg %p282
        %p461 = pneg %p306
        %p462 = pneg %p303
        %p463 = pneg %p327
        %p464 = pneg %p324
        %p465 = pneg %p353
        %p466 = pneg %p350
        %s467 = sand.u32 %s340, 1
        %s468 = scalar_lea.sflag [#allocation3], %s467
        %s469 = sand.u32 %s340, 1
        %s470 = smul.addr %s469, 2
        %s471 = scalar_lea.vmem [#allocation2], %s470
        %p472 = scmp.lt.s32.totalorder %s28, 1
        %s473 = scalar_select %p472, %s28, 1
        %s474 = smul.addr %s473, 2
        %s475 = scalar_lea.vmem %s0, %s474
        %p476 = scmp.lt.s32.totalorder %s28, 1
        %s477 = scalar_select %p476, %s28, 1
        %s478 = smul.addr %s477, 2
        %s479 = scalar_lea.vmem %s1, %s478
        %v481 = vlaneseq
        %v482 = vand.u32 %v481, 127
        %v483 = vld [vmem:[%s2] sm:$0xf]
        %v484 = vld [vmem:[%s2 + $0x4] sm:$0xf]
        %v485 = vld [vmem:[%s2 + $0x8] sm:$0xf]
        %v486 = vld [vmem:[%s2 + $0xc] sm:$0xf]
        %v487 = vld [vmem:[%s475] sm:$0x3]
        %v488 = vpack.c.bf16 %v487, %v487
        %v489 = vld [vmem:[%s3] sm:$0xff]
        %v490 = vld [vmem:[%s3 + $0x8] sm:$0xff]
        %v491 = vld [vmem:[%s3 + $0x10] sm:$0xff]
        %v492 = vld [vmem:[%s3 + $0x18] sm:$0xff]
        %494 = vset.pattern.permute.xlu0 0
        %495 = vperm.xlu0 %494, %v489
        %v496 = vpop.permute.xlu0 %495
        %499 = vset.pattern.permute.xlu0 0
        %500 = vperm.xlu0 %499, %v490
        %v501 = vpop.permute.xlu0 %500
        %504 = vset.pattern.permute.xlu0 0
        %505 = vperm.xlu0 %504, %v491
        %v506 = vpop.permute.xlu0 %505
        %509 = vset.pattern.permute.xlu0 0
        %510 = vperm.xlu0 %509, %v492
        %v511 = vpop.permute.xlu0 %510
        %v517 = vunpack.c.l.b16 %v483
        %v518 = vunpack.c.l.b16 %v484
        %v519 = vunpack.c.l.b16 %v485
        %v520 = vunpack.c.l.b16 %v486
        %v521 = vpack.c.b16 %v518, %v517
        %v522 = vpack.c.b16 %v520, %v519
        %vm523 = vcmask 15360
        %v525 = vsel %vm523, %v521, 0
        %v528 = vsel %vm523, %v522, 0
        %vm530 = vcmask 1040384
        %v532 = vsel %vm530, %v488, 0
        %534 = vmatpush.bf16.msra.mxu0 0
        %535 = vmatpush.bf16.msra.mxu0 0
        %536 = vmatpush.bf16.msra.mxu0 0
        %537 = vmatpush.bf16.msra.mxu0 0
        %538 = vmatpush.bf16.msra.mxu0 0
        %539 = vmatpush.bf16.msra.mxu0 0
        %540 = vmatpush.bf16.msra.mxu0 0
        %541 = vmatpush.bf16.msra.mxu0 %v532
        %542 = vmatmul.bf16.gmra.mxu0 %v525
        %v543 = vpop.f32.mrf.mxu0
        %v544 = vadd.f32 %v496, %v543
        %v545 = vpop.f32.mrf.mxu0
        %v546 = vadd.f32 %v501, %v545
        %547 = vmatmul.bf16.gmra.mxu0 %v528
        %v548 = vpop.f32.mrf.mxu0
        %v549 = vadd.f32 %v506, %v548
        %v550 = vpop.f32.mrf.mxu0
        %v551 = vadd.f32 %v511, %v550
        %552 = vdwg.mxu0
        %553 = vrot.lane.b32.xlu0 %v544, 1
        %v554 = vpop.permute.xlu0 %553
        %555 = vrot.lane.b32.xlu0 %v546, 1
        %v556 = vpop.permute.xlu0 %555
        %557 = vrot.lane.b32.xlu0 %v549, 1
        %v558 = vpop.permute.xlu0 %557
        %559 = vrot.lane.b32.xlu0 %v551, 1
        %v560 = vpop.permute.xlu0 %559
        %vm561 = vcmp.ge.s32.totalorder %v482, 1
        %v562 = vsel %vm561, 1, 0
        %vm563 = vcmp.eq.s32.totalorder %v562, 1
        %v564 = vsel %vm563, %v554, 0.0
        %v565 = vsel %vm563, %v556, 0.0
        %v566 = vsel %vm563, %v558, 0.0
        %v567 = vsel %vm563, %v560, 0.0
        %568 = vrot.lane.b32.xlu0 %v544, 127
        %v569 = vpop.permute.xlu0 %568
        %570 = vrot.lane.b32.xlu0 %v546, 127
        %v571 = vpop.permute.xlu0 %570
        %572 = vrot.lane.b32.xlu0 %v549, 127
        %v573 = vpop.permute.xlu0 %572
        %574 = vrot.lane.b32.xlu0 %v551, 127
        %v575 = vpop.permute.xlu0 %574
        %vm576 = vcmp.lt.s32.totalorder %v482, 127
        %v577 = vsel %vm576, 1, 0
        %vm578 = vcmp.eq.s32.totalorder %v577, 1
        %v579 = vsel %vm578, %v569, 0.0
        %v580 = vsel %vm578, %v571, 0.0
        %v581 = vsel %vm578, %v573, 0.0
        %v582 = vsel %vm578, %v575, 0.0
        %v583 = vpack.c.bf16 %v565, %v564
        %v584 = vpack.c.bf16 %v567, %v566
        %v585 = vpack.c.bf16 %v546, %v544
        %v586 = vpack.c.bf16 %v551, %v549
        %v587 = vpack.c.bf16 %v580, %v579
        %v588 = vpack.c.bf16 %v582, %v581
        %v589 = vld [vmem:[%s4] sm:$0xf]
        %v590 = vld [vmem:[%s4 + $0x4] sm:$0xf]
        %v591 = vld [vmem:[%s4 + $0x8] sm:$0xf]
        %v592 = vld [vmem:[%s4 + $0xc] sm:$0xf]
        %v593 = vld [vmem:[%s5] sm:$0xff]
        %v594 = vld [vmem:[%s5 + $0x8] sm:$0xff]
        %v595 = vld [vmem:[%s5 + $0x10] sm:$0xff]
        %v596 = vld [vmem:[%s5 + $0x18] sm:$0xff]
        %598 = vset.pattern.permute.xlu0 0
        %599 = vperm.xlu0 %598, %v593
        %v600 = vpop.permute.xlu0 %599
        %603 = vset.pattern.permute.xlu0 0
        %604 = vperm.xlu0 %603, %v594
        %v605 = vpop.permute.xlu0 %604
        %608 = vset.pattern.permute.xlu0 0
        %609 = vperm.xlu0 %608, %v595
        %v610 = vpop.permute.xlu0 %609
        %613 = vset.pattern.permute.xlu0 0
        %614 = vperm.xlu0 %613, %v596
        %v615 = vpop.permute.xlu0 %614
        %v621 = vunpack.c.l.b16 %v589
        %v622 = vunpack.c.l.b16 %v590
        %v623 = vunpack.c.l.b16 %v591
        %v624 = vunpack.c.l.b16 %v592
        %v625 = vpack.c.b16 %v622, %v621
        %v626 = vpack.c.b16 %v624, %v623
        %vm627 = vcmask 785408
        %v629 = vsel %vm627, %v625, 0
        %v632 = vsel %vm627, %v626, 0
        %634 = vmatpush.bf16.msra.mxu0 0
        %635 = vmatpush.bf16.msra.mxu0 0
        %636 = vmatpush.bf16.msra.mxu0 %v588
        %637 = vmatpush.bf16.msra.mxu0 %v587
        %638 = vmatpush.bf16.msra.mxu0 %v586
        %639 = vmatpush.bf16.msra.mxu0 %v585
        %640 = vmatpush.bf16.msra.mxu0 %v584
        %641 = vmatpush.bf16.msra.mxu0 %v583
        %642 = vmatmul.bf16.gmra.mxu0 %v629
        %v643 = vpop.f32.mrf.mxu0
        %v644 = vadd.f32 %v600, %v643
        %v645 = vpop.f32.mrf.mxu0
        %v646 = vadd.f32 %v605, %v645
        %647 = vmatmul.bf16.gmra.mxu0 %v632
        %v648 = vpop.f32.mrf.mxu0
        %v649 = vadd.f32 %v610, %v648
        %v650 = vpop.f32.mrf.mxu0
        %v651 = vadd.f32 %v615, %v650
        %652 = vdwg.mxu0
        %v653 = vld [vmem:[%s6] sm:$0xf]
        %v654 = vld [vmem:[%s6 + $0x4] sm:$0xf]
        %v655 = vld [vmem:[%s6 + $0x8] sm:$0xf]
        %v656 = vld [vmem:[%s6 + $0xc] sm:$0xf]
        %v657 = vld [vmem:[%s7] sm:$0xff]
        %v658 = vld [vmem:[%s7 + $0x8] sm:$0xff]
        %v659 = vld [vmem:[%s7 + $0x10] sm:$0xff]
        %v660 = vld [vmem:[%s7 + $0x18] sm:$0xff]
        %662 = vset.pattern.permute.xlu0 0
        %663 = vperm.xlu0 %662, %v657
        %v664 = vpop.permute.xlu0 %663
        %667 = vset.pattern.permute.xlu0 0
        %668 = vperm.xlu0 %667, %v658
        %v669 = vpop.permute.xlu0 %668
        %672 = vset.pattern.permute.xlu0 0
        %673 = vperm.xlu0 %672, %v659
        %v674 = vpop.permute.xlu0 %673
        %677 = vset.pattern.permute.xlu0 0
        %678 = vperm.xlu0 %677, %v660
        %v679 = vpop.permute.xlu0 %678
        %v685 = vunpack.c.l.b16 %v653
        %v686 = vunpack.c.l.b16 %v654
        %v687 = vunpack.c.l.b16 %v655
        %v688 = vunpack.c.l.b16 %v656
        %v689 = vpack.c.b16 %v686, %v685
        %v690 = vpack.c.b16 %v688, %v687
        %v692 = vsel %vm627, %v689, 0
        %v695 = vsel %vm627, %v690, 0
        %697 = vmatpush.bf16.msra.mxu0 0
        %698 = vmatpush.bf16.msra.mxu0 0
        %699 = vmatpush.bf16.msra.mxu0 %v588
        %700 = vmatpush.bf16.msra.mxu0 %v587
        %701 = vmatpush.bf16.msra.mxu0 %v586
        %702 = vmatpush.bf16.msra.mxu0 %v585
        %703 = vmatpush.bf16.msra.mxu0 %v584
        %704 = vmatpush.bf16.msra.mxu0 %v583
        %705 = vmatmul.bf16.gmra.mxu0 %v692
        %v706 = vpop.f32.mrf.mxu0
        %v707 = vadd.f32 %v664, %v706
        %v708 = vpop.f32.mrf.mxu0
        %v709 = vadd.f32 %v669, %v708
        %710 = vmatmul.bf16.gmra.mxu0 %v695
        %v711 = vpop.f32.mrf.mxu0
        %v712 = vadd.f32 %v674, %v711
        %v713 = vpop.f32.mrf.mxu0
        %v714 = vadd.f32 %v679, %v713
        %715 = vdwg.mxu0
        %v716 = vtanh.pop %v644
        %v717 = vtanh.pop %v646
        %v718 = vtanh.pop %v649
        %v719 = vtanh.pop %v651
        %v720 = vxor.u32 %v707, 2147483648
        %v721 = vxor.u32 %v709, 2147483648
        %v722 = vxor.u32 %v712, 2147483648
        %v723 = vxor.u32 %v714, 2147483648
        %v724 = vmul.f32 %v720, 1.442695
        %v725 = vpow.pop %v724
        %v726 = vmul.f32 %v721, 1.442695
        %v727 = vpow.pop %v726
        %v728 = vmul.f32 %v722, 1.442695
        %v729 = vpow.pop %v728
        %v730 = vmul.f32 %v723, 1.442695
        %v731 = vpow.pop %v730
        %v732 = vadd.f32 %v725, 1.0
        %v733 = vadd.f32 %v727, 1.0
        %v734 = vadd.f32 %v729, 1.0
        %v735 = vadd.f32 %v731, 1.0
        %v736 = vrcp.pop %v732
        %v737 = vmul.f32 %v732, %v736
        %v738 = vsub.f32 1.0, %v737
        %v739 = vmul.f32 %v736, %v738
        %v740 = vadd.f32 %v736, %v739
        %vm741 = vweird.f32 %v732
        %vm742 = vweird.f32 %v736
        %vm743 = vmor %vm741, %vm742
        %v744 = vsel %vm743, %v736, %v740
        %v745 = vand.u32 2147483647, %v732
        %vm746 = vcmp.eq.f32.partialorder %v745, 8.507059e+37
        %v747 = vand.u32 %v732, 2147483648
        %v748 = vor.u32 1.1754944e-38, %v747
        %v749 = vsel %vm746, %v748, %v744
        %v750 = vmul.f32 1.0, %v749
        %v751 = vrcp.pop %v733
        %v752 = vmul.f32 %v733, %v751
        %v753 = vsub.f32 1.0, %v752
        %v754 = vmul.f32 %v751, %v753
        %v755 = vadd.f32 %v751, %v754
        %vm756 = vweird.f32 %v733
        %vm757 = vweird.f32 %v751
        %vm758 = vmor %vm756, %vm757
        %v759 = vsel %vm758, %v751, %v755
        %v760 = vand.u32 2147483647, %v733
        %vm761 = vcmp.eq.f32.partialorder %v760, 8.507059e+37
        %v762 = vand.u32 %v733, 2147483648
        %v763 = vor.u32 1.1754944e-38, %v762
        %v764 = vsel %vm761, %v763, %v759
        %v765 = vmul.f32 1.0, %v764
        %v766 = vrcp.pop %v734
        %v767 = vmul.f32 %v734, %v766
        %v768 = vsub.f32 1.0, %v767
        %v769 = vmul.f32 %v766, %v768
        %v770 = vadd.f32 %v766, %v769
        %vm771 = vweird.f32 %v734
        %vm772 = vweird.f32 %v766
        %vm773 = vmor %vm771, %vm772
        %v774 = vsel %vm773, %v766, %v770
        %v775 = vand.u32 2147483647, %v734
        %vm776 = vcmp.eq.f32.partialorder %v775, 8.507059e+37
        %v777 = vand.u32 %v734, 2147483648
        %v778 = vor.u32 1.1754944e-38, %v777
        %v779 = vsel %vm776, %v778, %v774
        %v780 = vmul.f32 1.0, %v779
        %v781 = vrcp.pop %v735
        %v782 = vmul.f32 %v735, %v781
        %v783 = vsub.f32 1.0, %v782
        %v784 = vmul.f32 %v781, %v783
        %v785 = vadd.f32 %v781, %v784
        %vm786 = vweird.f32 %v735
        %vm787 = vweird.f32 %v781
        %vm788 = vmor %vm786, %vm787
        %v789 = vsel %vm788, %v781, %v785
        %v790 = vand.u32 2147483647, %v735
        %vm791 = vcmp.eq.f32.partialorder %v790, 8.507059e+37
        %v792 = vand.u32 %v735, 2147483648
        %v793 = vor.u32 1.1754944e-38, %v792
        %v794 = vsel %vm791, %v793, %v789
        %v795 = vmul.f32 1.0, %v794
        %v796 = vmul.f32 %v716, %v750
        %v797 = vmul.f32 %v717, %v765
        %v798 = vmul.f32 %v718, %v780
        %v799 = vmul.f32 %v719, %v795
        %v800 = vpack.c.bf16 %v797, %v796
        %v801 = vpack.c.bf16 %v799, %v798
        %v802 = vld [vmem:[%s8] sm:$0xf]
        %v803 = vld [vmem:[%s8 + $0x4] sm:$0xf]
        %v804 = vld [vmem:[%s8 + $0x8] sm:$0xf]
        %v805 = vld [vmem:[%s8 + $0xc] sm:$0xf]
        %v810 = vunpack.c.l.b16 %v802
        %v811 = vunpack.c.l.b16 %v803
        %v812 = vunpack.c.l.b16 %v804
        %v813 = vunpack.c.l.b16 %v805
        %v814 = vpack.c.b16 %v811, %v810
        %v815 = vpack.c.b16 %v813, %v812
        %vm816 = vcmask 261120
        %v818 = vsel %vm816, %v814, 0
        %v821 = vsel %vm816, %v815, 0
        %823 = vmatpush.bf16.msra.mxu0 0
        %824 = vmatpush.bf16.msra.mxu0 0
        %825 = vmatpush.bf16.msra.mxu0 0
        %826 = vmatpush.bf16.msra.mxu0 0
        %827 = vmatpush.bf16.msra.mxu0 0
        %828 = vmatpush.bf16.msra.mxu0 0
        %829 = vmatpush.bf16.msra.mxu0 %v801
        %830 = vmatpush.bf16.msra.mxu0 %v800
        %831 = vmatmul.bf16.gmra.mxu0 %v818
        %v832 = vpop.f32.mrf.mxu0
        %v833 = vadd.f32 0.0, %v832
        %v834 = vpop.f32.mrf.mxu0
        %v835 = vadd.f32 0.0, %v834
        %836 = vmatmul.bf16.gmra.mxu0 %v821
        %v837 = vpop.f32.mrf.mxu0
        %v838 = vadd.f32 0.0, %v837
        %v839 = vpop.f32.mrf.mxu0
        %v840 = vadd.f32 0.0, %v839
        %841 = vdwg.mxu0
        %v842 = vadd.f32 %v544, %v833
        %v843 = vadd.f32 %v546, %v835
        %v844 = vadd.f32 %v549, %v838
        %v845 = vadd.f32 %v551, %v840
        %v846 = vld [vmem:[%s9] sm:$0xff]
        %v847 = vld [vmem:[%s9 + $0x8] sm:$0xff]
        %v848 = vld [vmem:[%s9 + $0x10] sm:$0xff]
        %v849 = vld [vmem:[%s9 + $0x18] sm:$0xff]
        %851 = vset.pattern.permute.xlu0 0
        %852 = vperm.xlu0 %851, %v846
        %v853 = vpop.permute.xlu0 %852
        %856 = vset.pattern.permute.xlu0 0
        %857 = vperm.xlu0 %856, %v847
        %v858 = vpop.permute.xlu0 %857
        %861 = vset.pattern.permute.xlu0 0
        %862 = vperm.xlu0 %861, %v848
        %v863 = vpop.permute.xlu0 %862
        %866 = vset.pattern.permute.xlu0 0
        %867 = vperm.xlu0 %866, %v849
        %v868 = vpop.permute.xlu0 %867
        %v870 = vadd.f32 %v842, %v853
        %v871 = vadd.f32 %v843, %v858
        %v872 = vadd.f32 %v844, %v863
        %v873 = vadd.f32 %v845, %v868
        %v874 = vld [vmem:[%s10] sm:$0xf]
        %v875 = vld [vmem:[%s10 + $0x4] sm:$0xf]
        %v876 = vld [vmem:[%s10 + $0x8] sm:$0xf]
        %v877 = vld [vmem:[%s10 + $0xc] sm:$0xf]
        %v878 = vld [vmem:[%s11] sm:$0xff]
        %v879 = vld [vmem:[%s11 + $0x8] sm:$0xff]
        %v880 = vld [vmem:[%s11 + $0x10] sm:$0xff]
        %v881 = vld [vmem:[%s11 + $0x18] sm:$0xff]
        %883 = vset.pattern.permute.xlu0 0
        %884 = vperm.xlu0 %883, %v878
        %v885 = vpop.permute.xlu0 %884
        %888 = vset.pattern.permute.xlu0 0
        %889 = vperm.xlu0 %888, %v879
        %v890 = vpop.permute.xlu0 %889
        %893 = vset.pattern.permute.xlu0 0
        %894 = vperm.xlu0 %893, %v880
        %v895 = vpop.permute.xlu0 %894
        %898 = vset.pattern.permute.xlu0 0
        %899 = vperm.xlu0 %898, %v881
        %v900 = vpop.permute.xlu0 %899
        %v906 = vunpack.c.l.b16 %v874
        %v907 = vunpack.c.l.b16 %v875
        %v908 = vunpack.c.l.b16 %v876
        %v909 = vunpack.c.l.b16 %v877
        %v910 = vpack.c.b16 %v907, %v906
        %v911 = vpack.c.b16 %v909, %v908
        %v913 = vsel %vm816, %v910, 0
        %v916 = vsel %vm816, %v911, 0
        %918 = vmatpush.bf16.msra.mxu0 0
        %919 = vmatpush.bf16.msra.mxu0 0
        %920 = vmatpush.bf16.msra.mxu0 0
        %921 = vmatpush.bf16.msra.mxu0 0
        %922 = vmatpush.bf16.msra.mxu0 0
        %923 = vmatpush.bf16.msra.mxu0 0
        %924 = vmatpush.bf16.msra.mxu0 %v801
        %925 = vmatpush.bf16.msra.mxu0 %v800
        %926 = vmatmul.bf16.gmra.mxu0 %v913
        %v927 = vpop.f32.mrf.mxu0
        %v928 = vadd.f32 %v885, %v927
        %v929 = vpop.f32.mrf.mxu0
        %v930 = vadd.f32 %v890, %v929
        %931 = vmatmul.bf16.gmra.mxu0 %v916
        %v932 = vpop.f32.mrf.mxu0
        %v933 = vadd.f32 %v895, %v932
        %v934 = vpop.f32.mrf.mxu0
        %v935 = vadd.f32 %v900, %v934
        %936 = vdwg.mxu0
        %937 = vrot.lane.b32.xlu0 %v870, 2
        %v938 = vpop.permute.xlu0 %937
        %939 = vrot.lane.b32.xlu0 %v871, 2
        %v940 = vpop.permute.xlu0 %939
        %941 = vrot.lane.b32.xlu0 %v872, 2
        %v942 = vpop.permute.xlu0 %941
        %943 = vrot.lane.b32.xlu0 %v873, 2
        %v944 = vpop.permute.xlu0 %943
        %vm945 = vcmp.ge.s32.totalorder %v482, 2
        %v946 = vsel %vm945, 1, 0
        %vm947 = vcmp.eq.s32.totalorder %v946, 1
        %v948 = vsel %vm947, %v938, 0.0
        %v949 = vsel %vm947, %v940, 0.0
        %v950 = vsel %vm947, %v942, 0.0
        %v951 = vsel %vm947, %v944, 0.0
        %952 = vrot.lane.b32.xlu0 %v870, 126
        %v953 = vpop.permute.xlu0 %952
        %954 = vrot.lane.b32.xlu0 %v871, 126
        %v955 = vpop.permute.xlu0 %954
        %956 = vrot.lane.b32.xlu0 %v872, 126
        %v957 = vpop.permute.xlu0 %956
        %958 = vrot.lane.b32.xlu0 %v873, 126
        %v959 = vpop.permute.xlu0 %958
        %vm960 = vcmp.lt.s32.totalorder %v482, 126
        %v961 = vsel %vm960, 1, 0
        %vm962 = vcmp.eq.s32.totalorder %v961, 1
        %v963 = vsel %vm962, %v953, 0.0
        %v964 = vsel %vm962, %v955, 0.0
        %v965 = vsel %vm962, %v957, 0.0
        %v966 = vsel %vm962, %v959, 0.0
        %v967 = vpack.c.bf16 %v949, %v948
        %v968 = vpack.c.bf16 %v951, %v950
        %v969 = vpack.c.bf16 %v871, %v870
        %v970 = vpack.c.bf16 %v873, %v872
        %v971 = vpack.c.bf16 %v964, %v963
        %v972 = vpack.c.bf16 %v966, %v965
        %s973 = scalar_lea.vmem %s4, 16
        %v974 = vld [vmem:[%s973] sm:$0xf]
        %v975 = vld [vmem:[%s973 + $0x4] sm:$0xf]
        %v976 = vld [vmem:[%s973 + $0x8] sm:$0xf]
        %v977 = vld [vmem:[%s973 + $0xc] sm:$0xf]
        %s978 = scalar_lea.vmem %s5, 32
        %v979 = vld [vmem:[%s978] sm:$0xff]
        %v980 = vld [vmem:[%s978 + $0x8] sm:$0xff]
        %v981 = vld [vmem:[%s978 + $0x10] sm:$0xff]
        %v982 = vld [vmem:[%s978 + $0x18] sm:$0xff]
        %984 = vset.pattern.permute.xlu0 0
        %985 = vperm.xlu0 %984, %v979
        %v986 = vpop.permute.xlu0 %985
        %989 = vset.pattern.permute.xlu0 0
        %990 = vperm.xlu0 %989, %v980
        %v991 = vpop.permute.xlu0 %990
        %994 = vset.pattern.permute.xlu0 0
        %995 = vperm.xlu0 %994, %v981
        %v996 = vpop.permute.xlu0 %995
        %999 = vset.pattern.permute.xlu0 0
        %1000 = vperm.xlu0 %999, %v982
        %v1001 = vpop.permute.xlu0 %1000
        %v1007 = vunpack.c.l.b16 %v974
        %v1008 = vunpack.c.l.b16 %v975
        %v1009 = vunpack.c.l.b16 %v976
        %v1010 = vunpack.c.l.b16 %v977
        %v1011 = vpack.c.b16 %v1008, %v1007
        %v1012 = vpack.c.b16 %v1010, %v1009
        %v1014 = vsel %vm627, %v1011, 0
        %v1017 = vsel %vm627, %v1012, 0
        %1019 = vmatpush.bf16.msra.mxu0 0
        %1020 = vmatpush.bf16.msra.mxu0 0
        %1021 = vmatpush.bf16.msra.mxu0 %v972
        %1022 = vmatpush.bf16.msra.mxu0 %v971
        %1023 = vmatpush.bf16.msra.mxu0 %v970
        %1024 = vmatpush.bf16.msra.mxu0 %v969
        %1025 = vmatpush.bf16.msra.mxu0 %v968
        %1026 = vmatpush.bf16.msra.mxu0 %v967
        %1027 = vmatmul.bf16.gmra.mxu0 %v1014
        %v1028 = vpop.f32.mrf.mxu0
        %v1029 = vadd.f32 %v986, %v1028
        %v1030 = vpop.f32.mrf.mxu0
        %v1031 = vadd.f32 %v991, %v1030
        %1032 = vmatmul.bf16.gmra.mxu0 %v1017
        %v1033 = vpop.f32.mrf.mxu0
        %v1034 = vadd.f32 %v996, %v1033
        %v1035 = vpop.f32.mrf.mxu0
        %v1036 = vadd.f32 %v1001, %v1035
        %1037 = vdwg.mxu0
        %s1038 = scalar_lea.vmem %s6, 16
        %v1039 = vld [vmem:[%s1038] sm:$0xf]
        %v1040 = vld [vmem:[%s1038 + $0x4] sm:$0xf]
        %v1041 = vld [vmem:[%s1038 + $0x8] sm:$0xf]
        %v1042 = vld [vmem:[%s1038 + $0xc] sm:$0xf]
        %s1043 = scalar_lea.vmem %s7, 32
        %v1044 = vld [vmem:[%s1043] sm:$0xff]
        %v1045 = vld [vmem:[%s1043 + $0x8] sm:$0xff]
        %v1046 = vld [vmem:[%s1043 + $0x10] sm:$0xff]
        %v1047 = vld [vmem:[%s1043 + $0x18] sm:$0xff]
        %1049 = vset.pattern.permute.xlu0 0
        %1050 = vperm.xlu0 %1049, %v1044
        %v1051 = vpop.permute.xlu0 %1050
        %1054 = vset.pattern.permute.xlu0 0
        %1055 = vperm.xlu0 %1054, %v1045
        %v1056 = vpop.permute.xlu0 %1055
        %1059 = vset.pattern.permute.xlu0 0
        %1060 = vperm.xlu0 %1059, %v1046
        %v1061 = vpop.permute.xlu0 %1060
        %1064 = vset.pattern.permute.xlu0 0
        %1065 = vperm.xlu0 %1064, %v1047
        %v1066 = vpop.permute.xlu0 %1065
        %v1072 = vunpack.c.l.b16 %v1039
        %v1073 = vunpack.c.l.b16 %v1040
        %v1074 = vunpack.c.l.b16 %v1041
        %v1075 = vunpack.c.l.b16 %v1042
        %v1076 = vpack.c.b16 %v1073, %v1072
        %v1077 = vpack.c.b16 %v1075, %v1074
        %v1079 = vsel %vm627, %v1076, 0
        %v1082 = vsel %vm627, %v1077, 0
        %1084 = vmatpush.bf16.msra.mxu0 0
        %1085 = vmatpush.bf16.msra.mxu0 0
        %1086 = vmatpush.bf16.msra.mxu0 %v972
        %1087 = vmatpush.bf16.msra.mxu0 %v971
        %1088 = vmatpush.bf16.msra.mxu0 %v970
        %1089 = vmatpush.bf16.msra.mxu0 %v969
        %1090 = vmatpush.bf16.msra.mxu0 %v968
        %1091 = vmatpush.bf16.msra.mxu0 %v967
        %1092 = vmatmul.bf16.gmra.mxu0 %v1079
        %v1093 = vpop.f32.mrf.mxu0
        %v1094 = vadd.f32 %v1051, %v1093
        %v1095 = vpop.f32.mrf.mxu0
        %v1096 = vadd.f32 %v1056, %v1095
        %1097 = vmatmul.bf16.gmra.mxu0 %v1082
        %v1098 = vpop.f32.mrf.mxu0
        %v1099 = vadd.f32 %v1061, %v1098
        %v1100 = vpop.f32.mrf.mxu0
        %v1101 = vadd.f32 %v1066, %v1100
        %1102 = vdwg.mxu0
        %v1103 = vtanh.pop %v1029
        %v1104 = vtanh.pop %v1031
        %v1105 = vtanh.pop %v1034
        %v1106 = vtanh.pop %v1036
        %v1107 = vxor.u32 %v1094, 2147483648
        %v1108 = vxor.u32 %v1096, 2147483648
        %v1109 = vxor.u32 %v1099, 2147483648
        %v1110 = vxor.u32 %v1101, 2147483648
        %v1111 = vmul.f32 %v1107, 1.442695
        %v1112 = vpow.pop %v1111
        %v1113 = vmul.f32 %v1108, 1.442695
        %v1114 = vpow.pop %v1113
        %v1115 = vmul.f32 %v1109, 1.442695
        %v1116 = vpow.pop %v1115
        %v1117 = vmul.f32 %v1110, 1.442695
        %v1118 = vpow.pop %v1117
        %v1119 = vadd.f32 %v1112, 1.0
        %v1120 = vadd.f32 %v1114, 1.0
        %v1121 = vadd.f32 %v1116, 1.0
        %v1122 = vadd.f32 %v1118, 1.0
        %v1123 = vrcp.pop %v1119
        %v1124 = vmul.f32 %v1119, %v1123
        %v1125 = vsub.f32 1.0, %v1124
        %v1126 = vmul.f32 %v1123, %v1125
        %v1127 = vadd.f32 %v1123, %v1126
        %vm1128 = vweird.f32 %v1119
        %vm1129 = vweird.f32 %v1123
        %vm1130 = vmor %vm1128, %vm1129
        %v1131 = vsel %vm1130, %v1123, %v1127
        %v1132 = vand.u32 2147483647, %v1119
        %vm1133 = vcmp.eq.f32.partialorder %v1132, 8.507059e+37
        %v1134 = vand.u32 %v1119, 2147483648
        %v1135 = vor.u32 1.1754944e-38, %v1134
        %v1136 = vsel %vm1133, %v1135, %v1131
        %v1137 = vmul.f32 1.0, %v1136
        %v1138 = vrcp.pop %v1120
        %v1139 = vmul.f32 %v1120, %v1138
        %v1140 = vsub.f32 1.0, %v1139
        %v1141 = vmul.f32 %v1138, %v1140
        %v1142 = vadd.f32 %v1138, %v1141
        %vm1143 = vweird.f32 %v1120
        %vm1144 = vweird.f32 %v1138
        %vm1145 = vmor %vm1143, %vm1144
        %v1146 = vsel %vm1145, %v1138, %v1142
        %v1147 = vand.u32 2147483647, %v1120
        %vm1148 = vcmp.eq.f32.partialorder %v1147, 8.507059e+37
        %v1149 = vand.u32 %v1120, 2147483648
        %v1150 = vor.u32 1.1754944e-38, %v1149
        %v1151 = vsel %vm1148, %v1150, %v1146
        %v1152 = vmul.f32 1.0, %v1151
        %v1153 = vrcp.pop %v1121
        %v1154 = vmul.f32 %v1121, %v1153
        %v1155 = vsub.f32 1.0, %v1154
        %v1156 = vmul.f32 %v1153, %v1155
        %v1157 = vadd.f32 %v1153, %v1156
        %vm1158 = vweird.f32 %v1121
        %vm1159 = vweird.f32 %v1153
        %vm1160 = vmor %vm1158, %vm1159
        %v1161 = vsel %vm1160, %v1153, %v1157
        %v1162 = vand.u32 2147483647, %v1121
        %vm1163 = vcmp.eq.f32.partialorder %v1162, 8.507059e+37
        %v1164 = vand.u32 %v1121, 2147483648
        %v1165 = vor.u32 1.1754944e-38, %v1164
        %v1166 = vsel %vm1163, %v1165, %v1161
        %v1167 = vmul.f32 1.0, %v1166
        %v1168 = vrcp.pop %v1122
        %v1169 = vmul.f32 %v1122, %v1168
        %v1170 = vsub.f32 1.0, %v1169
        %v1171 = vmul.f32 %v1168, %v1170
        %v1172 = vadd.f32 %v1168, %v1171
        %vm1173 = vweird.f32 %v1122
        %vm1174 = vweird.f32 %v1168
        %vm1175 = vmor %vm1173, %vm1174
        %v1176 = vsel %vm1175, %v1168, %v1172
        %v1177 = vand.u32 2147483647, %v1122
        %vm1178 = vcmp.eq.f32.partialorder %v1177, 8.507059e+37
        %v1179 = vand.u32 %v1122, 2147483648
        %v1180 = vor.u32 1.1754944e-38, %v1179
        %v1181 = vsel %vm1178, %v1180, %v1176
        %v1182 = vmul.f32 1.0, %v1181
        %v1183 = vmul.f32 %v1103, %v1137
        %v1184 = vmul.f32 %v1104, %v1152
        %v1185 = vmul.f32 %v1105, %v1167
        %v1186 = vmul.f32 %v1106, %v1182
        %v1187 = vpack.c.bf16 %v1184, %v1183
        %v1188 = vpack.c.bf16 %v1186, %v1185
        %s1189 = scalar_lea.vmem %s10, 16
        %v1190 = vld [vmem:[%s1189] sm:$0xf]
        %v1191 = vld [vmem:[%s1189 + $0x4] sm:$0xf]
        %v1192 = vld [vmem:[%s1189 + $0x8] sm:$0xf]
        %v1193 = vld [vmem:[%s1189 + $0xc] sm:$0xf]
        %v1198 = vunpack.c.l.b16 %v1190
        %v1199 = vunpack.c.l.b16 %v1191
        %v1200 = vunpack.c.l.b16 %v1192
        %v1201 = vunpack.c.l.b16 %v1193
        %v1202 = vpack.c.b16 %v1199, %v1198
        %v1203 = vpack.c.b16 %v1201, %v1200
        %v1205 = vsel %vm816, %v1202, 0
        %v1208 = vsel %vm816, %v1203, 0
        %1210 = vmatpush.bf16.msra.mxu0 0
        %1211 = vmatpush.bf16.msra.mxu0 0
        %1212 = vmatpush.bf16.msra.mxu0 0
        %1213 = vmatpush.bf16.msra.mxu0 0
        %1214 = vmatpush.bf16.msra.mxu0 0
        %1215 = vmatpush.bf16.msra.mxu0 0
        %1216 = vmatpush.bf16.msra.mxu0 %v1188
        %1217 = vmatpush.bf16.msra.mxu0 %v1187
        %1218 = vmatmul.bf16.gmra.mxu0 %v1205
        %v1219 = vpop.f32.mrf.mxu0
        %v1220 = vadd.f32 0.0, %v1219
        %v1221 = vpop.f32.mrf.mxu0
        %v1222 = vadd.f32 0.0, %v1221
        %1223 = vmatmul.bf16.gmra.mxu0 %v1208
        %v1224 = vpop.f32.mrf.mxu0
        %v1225 = vadd.f32 0.0, %v1224
        %v1226 = vpop.f32.mrf.mxu0
        %v1227 = vadd.f32 0.0, %v1226
        %1228 = vdwg.mxu0
        %v1229 = vadd.f32 %v928, %v1220
        %v1230 = vadd.f32 %v930, %v1222
        %v1231 = vadd.f32 %v933, %v1225
        %v1232 = vadd.f32 %v935, %v1227
        %s1233 = scalar_lea.vmem %s11, 32
        %v1234 = vld [vmem:[%s1233] sm:$0xff]
        %v1235 = vld [vmem:[%s1233 + $0x8] sm:$0xff]
        %v1236 = vld [vmem:[%s1233 + $0x10] sm:$0xff]
        %v1237 = vld [vmem:[%s1233 + $0x18] sm:$0xff]
        %1239 = vset.pattern.permute.xlu0 0
        %1240 = vperm.xlu0 %1239, %v1234
        %v1241 = vpop.permute.xlu0 %1240
        %1244 = vset.pattern.permute.xlu0 0
        %1245 = vperm.xlu0 %1244, %v1235
        %v1246 = vpop.permute.xlu0 %1245
        %1249 = vset.pattern.permute.xlu0 0
        %1250 = vperm.xlu0 %1249, %v1236
        %v1251 = vpop.permute.xlu0 %1250
        %1254 = vset.pattern.permute.xlu0 0
        %1255 = vperm.xlu0 %1254, %v1237
        %v1256 = vpop.permute.xlu0 %1255
        %v1258 = vadd.f32 %v1229, %v1241
        %v1259 = vadd.f32 %v1230, %v1246
        %v1260 = vadd.f32 %v1231, %v1251
        %v1261 = vadd.f32 %v1232, %v1256
        %v1262 = vld [vmem:[%s12] sm:$0x1]
        %v1263 = vpack.c.bf16 %v1259, %v1258
        %v1264 = vpack.c.bf16 %v1261, %v1260
        %v1265 = vld [vmem:[%s13] sm:$0x3]
        %1267 = vset.pattern.permute.xlu0 0
        %1268 = vperm.xlu0 %1267, %v1265
        %v1269 = vpop.permute.xlu0 %1268
        %v1272 = vsel %vm816, %v1262, 0
        %1274 = vmatpush.bf16.msra.mxu0 0
        %1275 = vmatpush.bf16.msra.mxu0 0
        %1276 = vmatpush.bf16.msra.mxu0 0
        %1277 = vmatpush.bf16.msra.mxu0 0
        %1278 = vmatpush.bf16.msra.mxu0 0
        %1279 = vmatpush.bf16.msra.mxu0 0
        %1280 = vmatpush.bf16.msra.mxu0 %v1264
        %1281 = vmatpush.bf16.msra.mxu0 %v1263
        %1282 = vmatmul.bf16.gmra.mxu0 %v1272
        %v1283 = vpop.f32.mrf.mxu0
        %v1284 = vadd.f32 %v1269, %v1283
        %v1285 = vpop.f32.mrf.mxu0
        %1286 = vdwg.mxu0
        %v1287 = vld [vmem:[%s479] sm:$0x3]
        %v1288 = vadd.f32 %v1284, %v1287
        %1289 = vst [vmem:[%s471] sm:$0x3] %v1288
        %s1290 = sand.u32 %s340, 1
        %s1291 = scalar_lea.sflag [#allocation3], %s1290
        %s1292 = sand.u32 %s340, 1
        %s1293 = smul.addr %s1292, 2
        %s1294 = scalar_lea.vmem [#allocation2], %s1293
        // Predicated region
        $region77: #{tpu_custom_call.1} parent=75 // pred_check
          %p1295 = pneg %p350
        $region78: #{tpu_custom_call.1} parent=75 // pred_check_branch
          %1297 = sbr.rel (%p1295) target = $region80
        $region79: #{tpu_custom_call.1} parent=75 // pred_region
          %1299 = vsyncadd %s1291, 0
          %s1300 = smul.addr %s28, 2
          %s1301 = scalar_lea.hbm %s14, %s1300
          %s1303 = sshll.u32 %s1294, 4
          %s1304 = int_to_ptr.vmem [resolvable:$true] %s1303
          %s1305 = sshll.u32 %s1301, 4
          %s1306 = int_to_ptr.hbm [resolvable:$true] %s1305
          %1308 = dma.vmem_to_hbm [thread:$0]  %s1304, 32, %s1306, %s1291
        $region80: #{tpu_custom_call.1} parent=75 // pred_fallthru
          _
      $region76: #{tpu_custom_call.1} parent=5 // pred_fallthru
        _
      %p1309 = scmp.le.s32.totalorder 2, %s23
      // Predicated region
      $region81: #{tpu_custom_call.1} parent=5 // pred_check
        %p1310 = pneg %p1309
      $region82: #{tpu_custom_call.1} parent=5 // pred_check_branch
        %1312 = sbr.rel (%p1310) target = $region84
      $region83: #{tpu_custom_call.1} parent=5 // pred_region
        %s1313 = ssub.s32 %s23, 2
        // Predicated region
        $region85: #{tpu_custom_call.1} parent=83 // pred_check
          %p1314 = pneg %p356
        $region86: #{tpu_custom_call.1} parent=83 // pred_check_branch
          %1316 = sbr.rel (%p1314) target = $region88
        $region87: #{tpu_custom_call.1} parent=83 // pred_region
          %s1317 = sand.u32 %s341, 1
          %s1318 = scalar_lea.sflag [#allocation3], %s1317
          %s1319 = sand.u32 %s341, 1
          %s1320 = smul.addr %s1319, 2
          %s1321 = scalar_lea.vmem [#allocation2], %s1320
          %1323 = dma.done %s1318, 32
        $region88: #{tpu_custom_call.1} parent=83 // pred_fallthru
          _
      $region84: #{tpu_custom_call.1} parent=5 // pred_fallthru
        _
    $region6: #{tpu_custom_call.1} parent=1 // loop_footer
      %s27 = sadd.s32 1, %s23
    $region7: #{tpu_custom_call.1} parent=1 // loop_footer_branch
      %22 = sbr.rel target = $region3
    $region8: #{tpu_custom_call.1} parent=1 // loop_exit
      _
    %1324 = vsyncpa [#allocation3], 1
    %s1325 = scalar_lea.sflag [#allocation3], 1
    %1326 = vsyncpa %s1325, 1

</llo_original>
